<compile_context>
chip_gen: v6e
topology: v6e:2x2x1
jax: 0.10.0
libtpu: 0.0.40
codegen_flags: <defaults>
</compile_context>

<pallas_src>
import functools
import inspect

import jax
import jax.numpy as jnp
from jax.experimental import pallas as pl
from jax.experimental.pallas import tpu as pltpu

N_WIRES = 3606                       # fixed by the module
LANE = 128
SUBLANE = 8


def _cdiv(a, b):
    return (a + b - 1) // b


def _round_up(n, m):
    return ((n + m - 1) // m) * m


def _padded_bytes(shape, itemsize=4):
    """VMEM footprint of a 2-D f32 buffer after (8, 128) tile padding."""
    rows = _round_up(int(shape[-2]), SUBLANE)
    cols = _round_up(int(shape[-1]), LANE)
    return rows * cols * itemsize


def _vmem_capacity_bytes():
    try:
        return int(pltpu.get_tpu_info().vmem_capacity_bytes)
    except Exception:
        return 64 << 20  # conservative default (v7x per-core VMEM)


_HAS_PIPELINE_MODE = (
    hasattr(pl, "Buffered")
    and "pipeline_mode" in inspect.signature(pl.BlockSpec).parameters
)


def _resident_spec(shape):
    """Constant-index BlockSpec for a VMEM-resident parameter (DMA'd once)."""
    index_map = lambda i: (0, 0)
    if _HAS_PIPELINE_MODE:
        # Single-buffer the never-changing block (saves ~2x the weight VMEM).
        return pl.BlockSpec(shape, index_map, pipeline_mode=pl.Buffered(1))
    return pl.BlockSpec(shape, index_map)


def vae_kernel(x_ref, w1_ref, b1_ref, w2_ref, b2_ref, y_ref):
    # Encoder: tanh(x @ W1t + b1) -> (TB, enc_dim); f32 accumulate on the MXU.
    h = jnp.tanh(
        jnp.dot(x_ref[...], w1_ref[...], preferred_element_type=jnp.float32)
        + b1_ref[...]
    )
    # Decoder: h @ W2t + b2 -> (TB, n_wires).
    y = jnp.dot(h, w2_ref[...], preferred_element_type=jnp.float32) + b2_ref[...]
    y_ref[...] = y.astype(y_ref.dtype)


def prepare_params(w1, b1, w2, b2):
    """One-time prep: transpose weights / reshape biases (no feature padding).

    w1: (enc_dim, n_wires), b1: (enc_dim,), w2: (n_wires, enc_dim), b2: (n_wires,)
    NOTE: if accuracy tolerance allows, storing w1t/w2t (and x) as bfloat16 here
    would halve HBM traffic on this memory-bound kernel (keep f32 MXU accumulate);
    kept f32 to preserve the 1e-4 reference tolerance.
    """
    enc_dim = w1.shape[0]
    w1t = w1.T                        # (n_wires, enc_dim)
    w2t = w2.T                        # (enc_dim, n_wires)
    b1r = b1.reshape(1, enc_dim)      # (1, enc_dim)
    b2r = b2.reshape(1, N_WIRES)      # (1, n_wires)
    return w1t, b1r, w2t, b2r


def _choose_batch_tile(batch, tb_max=None):
    """Generation-aware batch tile.

    * cap 1024 rows on 128 MiB-VMEM parts (v5e/v6e), 512 on 64 MiB (v7x)
    * >= 2 grid steps when batch >= 16 so the "parallel" axis can use both v7x
      TensorCores (harmless on single-TC chips)
    * TB ~= batch / n_steps so batch padding waste stays under one sublane group
    """
    vmem = _vmem_capacity_bytes()
    cap = 1024 if vmem >= (100 << 20) else 512
    if tb_max is not None:
        cap = max(SUBLANE, min(cap, _round_up(int(tb_max), SUBLANE)))
    min_steps = 2 if batch >= 16 else 1
    n_steps = max(min_steps, _cdiv(batch, cap))
    return min(cap, _round_up(_cdiv(batch, n_steps), SUBLANE))


@functools.partial(jax.jit, static_argnames=("tb",))
def _vae_forward_impl(x, w1t, b1r, w2t, b2r, *, tb):
    B, F = x.shape
    enc_dim = w1t.shape[1]
    TB = tb
    grid = (_cdiv(B, TB),)

    # VMEM budget: double-buffered x-in / y-out tiles + allowance for in-kernel
    # f32 intermediates + resident params + compiler slack, clamped to capacity.
    tile_bytes = _padded_bytes((TB, F))
    param_bytes = (
        _padded_bytes((F, enc_dim))
        + _padded_bytes((1, enc_dim))
        + _padded_bytes((enc_dim, F))
        + _padded_bytes((1, F))
    )
    param_bufs = 1 if _HAS_PIPELINE_MODE else 2
    vmem_limit = int(
        2 * 2 * tile_bytes           # double-buffered x / y tiles
        + 2 * tile_bytes             # decoder f32 intermediate headroom
        + param_bufs * param_bytes   # resident weights / biases
        + (8 << 20)                  # compiler scratch slack
    )
    vmem_limit = min(vmem_limit, _vmem_capacity_bytes())

    return pl.pallas_call(
        vae_kernel,
        out_shape=jax.ShapeDtypeStruct((B, F), x.dtype),
        grid_spec=pltpu.PrefetchScalarGridSpec(
            num_scalar_prefetch=0,
            grid=grid,
            in_specs=[
                pl.BlockSpec((TB, F), lambda i: (i, 0)),   # x tile (double-buffered)
                _resident_spec((F, enc_dim)),              # W1t  (VMEM-resident)
                _resident_spec((1, enc_dim)),              # b1
                _resident_spec((enc_dim, F)),              # W2t
                _resident_spec((1, F)),                    # b2
            ],
            out_specs=pl.BlockSpec((TB, F), lambda i: (i, 0)),  # y tile
        ),
        compiler_params=pltpu.CompilerParams(
            dimension_semantics=("parallel",),
            vmem_limit_bytes=vmem_limit,
        ),
    )(x, w1t, b1r, w2t, b2r)


def vae_forward(x, w1t, b1r, w2t, b2r, *, tb_max=None):
    """x: (B, n_wires) float32; params from prepare_params(). Returns (B, n_wires)."""
    # TODO(synk): for tiny-batch inference (B <~ 64) per-call latency is dominated
    # by the ~1 MiB weight DMA; keeping weights VMEM-resident across calls
    # (cross-pallas_call persistence) or bf16/int8 weights is the lever there.
    tb = _choose_batch_tile(x.shape[0], tb_max)
    return _vae_forward_impl(x, w1t, b1r, w2t, b2r, tb=tb)


def init_params(key, encoded_dim):
    """Deterministic PyTorch-style Linear init: U(-1/sqrt(fan_in), 1/sqrt(fan_in))."""
    k1, k2, k3, k4 = jax.random.split(key, 4)
    bound1 = 1.0 / jnp.sqrt(float(N_WIRES))
    bound2 = 1.0 / jnp.sqrt(float(encoded_dim))
    w1 = jax.random.uniform(k1, (encoded_dim, N_WIRES), jnp.float32, -bound1, bound1)
    b1 = jax.random.uniform(k2, (encoded_dim,), jnp.float32, -bound1, bound1)
    w2 = jax.random.uniform(k3, (N_WIRES, encoded_dim), jnp.float32, -bound2, bound2)
    b2 = jax.random.uniform(k4, (N_WIRES,), jnp.float32, -bound2, bound2)
    return w1, b1, w2, b2


def vae_ref(x, w1, b1, w2, b2):
    h = jnp.tanh(x @ w1.T + b1)
    return h @ w2.T + b2


if __name__ == "__main__":
    key = jax.random.PRNGKey(0)
    kx, kp = jax.random.split(key)

    batch = 8
    encoded_dim = 32

    x = jax.random.normal(kx, (batch, N_WIRES), jnp.float32)
    w1, b1, w2, b2 = init_params(kp, encoded_dim)

    # One-time parameter preparation (transpose + reshape), amortized across calls.
    w1t, b1r, w2t, b2r = prepare_params(w1, b1, w2, b2)
    w1t, b1r, w2t, b2r = jax.block_until_ready((w1t, b1r, w2t, b2r))

    y = vae_forward(x, w1t, b1r, w2t, b2r)
    y = jax.block_until_ready(y)

    y_ref = vae_ref(x, w1, b1, w2, b2)
    assert y.shape == (batch, N_WIRES)
    assert jnp.allclose(y, y_ref, atol=1e-4, rtol=1e-4), "mismatch vs reference"

    print("KERNEL_OK")
</pallas_src>

<mosaic_0001>
module attributes {stable_mosaic.version = 11 : i64} {
  func.func @vae_kernel(%arg0: i32, %arg1: memref<8x3606xf32, #tpu.memory_space<vmem>>, %arg2: memref<3606x32xf32, #tpu.memory_space<vmem>>, %arg3: memref<1x32xf32, #tpu.memory_space<vmem>>, %arg4: memref<32x3606xf32, #tpu.memory_space<vmem>>, %arg5: memref<1x3606xf32, #tpu.memory_space<vmem>>, %arg6: memref<8x3606xf32, #tpu.memory_space<vmem>>) attributes {dimension_semantics = [#tpu.dimension_semantics<parallel>], iteration_bounds = array<i64: 1>, scalar_prefetch = 0 : i64, scratch_operands = 0 : i64, tpu.core_type = #tpu.core_type<tc>, window_params = [{transform_indices = @transform_0, window_bounds = array<i64: 8, 3606>}, {pipeline_mode = #tpu.pipeline_mode<synchronous>, transform_indices = @transform_1, window_bounds = array<i64: 3606, 32>}, {pipeline_mode = #tpu.pipeline_mode<synchronous>, transform_indices = @transform_2, window_bounds = array<i64: 1, 32>}, {pipeline_mode = #tpu.pipeline_mode<synchronous>, transform_indices = @transform_3, window_bounds = array<i64: 32, 3606>}, {pipeline_mode = #tpu.pipeline_mode<synchronous>, transform_indices = @transform_4, window_bounds = array<i64: 1, 3606>}, {transform_indices = @transform_5, window_bounds = array<i64: 8, 3606>}]} {
    %c0 = arith.constant 0 : index
    %c0_0 = arith.constant 0 : index
    %0 = vector.load %arg1[%c0, %c0_0] : memref<8x3606xf32, #tpu.memory_space<vmem>>, vector<8x3606xf32>
    %c0_1 = arith.constant 0 : index
    %c0_2 = arith.constant 0 : index
    %1 = vector.load %arg2[%c0_1, %c0_2] : memref<3606x32xf32, #tpu.memory_space<vmem>>, vector<3606x32xf32>
    %cst = arith.constant dense<0.000000e+00> : vector<8x32xf32>
    %2 = tpu.matmul %0, %1, %cst {dimension_numbers = #tpu.dot_dimension_numbers<[1], [0], [0], [1], [0, 0, 1, 1], [], []>} : vector<8x3606xf32>, vector<3606x32xf32>, vector<8x32xf32> -> vector<8x32xf32>
    %c0_3 = arith.constant 0 : index
    %c0_4 = arith.constant 0 : index
    %3 = vector.load %arg3[%c0_3, %c0_4] : memref<1x32xf32, #tpu.memory_space<vmem>>, vector<1x32xf32>
    %4 = vector.broadcast %3 : vector<1x32xf32> to vector<8x32xf32>
    %5 = arith.addf %2, %4 : vector<8x32xf32>
    %6 = math.tanh %5 : vector<8x32xf32>
    %c0_5 = arith.constant 0 : index
    %c0_6 = arith.constant 0 : index
    %7 = vector.load %arg4[%c0_5, %c0_6] : memref<32x3606xf32, #tpu.memory_space<vmem>>, vector<32x3606xf32>
    %cst_7 = arith.constant dense<0.000000e+00> : vector<8x3606xf32>
    %8 = tpu.matmul %6, %7, %cst_7 {dimension_numbers = #tpu.dot_dimension_numbers<[1], [0], [0], [1], [0, 0, 1, 1], [], []>} : vector<8x32xf32>, vector<32x3606xf32>, vector<8x3606xf32> -> vector<8x3606xf32>
    %c0_8 = arith.constant 0 : index
    %c0_9 = arith.constant 0 : index
    %9 = vector.load %arg5[%c0_8, %c0_9] : memref<1x3606xf32, #tpu.memory_space<vmem>>, vector<1x3606xf32>
    %10 = vector.broadcast %9 : vector<1x3606xf32> to vector<8x3606xf32>
    %11 = arith.addf %8, %10 : vector<8x3606xf32>
    %c0_10 = arith.constant 0 : index
    %c0_11 = arith.constant 0 : index
    %12 = vector.load %arg6[%c0_10, %c0_11] : memref<8x3606xf32, #tpu.memory_space<vmem>>, vector<8x3606xf32>
    tpu.vector_store %arg6[%c0_10, %c0_11], %11 {strides = array<i32>} : memref<8x3606xf32, #tpu.memory_space<vmem>>, vector<8x3606xf32>,
    return
  }
  func.func @transform_0(%arg0: i32) -> (i32, i32) {
    %c0_i32 = arith.constant 0 : i32
    %c0_i32_0 = arith.constant 0 : i32
    return %arg0, %c0_i32 : i32, i32
  }
  func.func @transform_1(%arg0: i32) -> (i32, i32) {
    %c0_i32 = arith.constant 0 : i32
    %c0_i32_0 = arith.constant 0 : i32
    %c0_i32_1 = arith.constant 0 : i32
    return %c0_i32, %c0_i32_0 : i32, i32
  }
  func.func @transform_2(%arg0: i32) -> (i32, i32) {
    %c0_i32 = arith.constant 0 : i32
    %c0_i32_0 = arith.constant 0 : i32
    %c0_i32_1 = arith.constant 0 : i32
    return %c0_i32, %c0_i32_0 : i32, i32
  }
  func.func @transform_3(%arg0: i32) -> (i32, i32) {
    %c0_i32 = arith.constant 0 : i32
    %c0_i32_0 = arith.constant 0 : i32
    %c0_i32_1 = arith.constant 0 : i32
    return %c0_i32, %c0_i32_0 : i32, i32
  }
  func.func @transform_4(%arg0: i32) -> (i32, i32) {
    %c0_i32 = arith.constant 0 : i32
    %c0_i32_0 = arith.constant 0 : i32
    %c0_i32_1 = arith.constant 0 : i32
    return %c0_i32, %c0_i32_0 : i32, i32
  }
  func.func @transform_5(%arg0: i32) -> (i32, i32) {
    %c0_i32 = arith.constant 0 : i32
    %c0_i32_0 = arith.constant 0 : i32
    return %arg0, %c0_i32 : i32, i32
  }
}

</mosaic_0001>

<llo_original>
// kernel: _vae_forward_impl.1
$region0: #{_vae_forward_impl.1}
  #allocation0 [shape = 'u32[]', space=smem, size = 0x4, offset = 0x4, fixed_abs, tag = 'smem constant byte address 0x4 - core index']
  #allocation1 [shape = 'u32[144,128]{1,0:T(1,128)}', space=vmem, size = 0x12000, scoped, tag = 'internal scratch']
  %s0 = inlined_call_operand.vmem [shape: f32[8,3606], index: 0, kind: input, shape index: {}]
  %s1 = inlined_call_operand.vmem [shape: f32[3606,32], index: 1, kind: input, shape index: {}]
  %s2 = inlined_call_operand.vmem [shape: f32[1,32], index: 2, kind: input, shape index: {}]
  %s3 = inlined_call_operand.vmem [shape: f32[32,3606], index: 3, kind: input, shape index: {}]
  %s4 = inlined_call_operand.vmem [shape: f32[1,3606], index: 4, kind: input, shape index: {}]
  %s5 = inlined_call_operand.hbm [shape: f32[8,3606], index: 5, kind: output, shape index: {}]
  %s6 = sld [smem:[#allocation0]]
  $region30: #{_vae_forward_impl.1} parent=0
    _
  %s8 = ssub.s32 1, %s6
  %s9 = scalar_select 0, %s8, %s6
  $region1: #{_vae_forward_impl.1} parent=0
    #allocation2 [shape = 'u8[118784]{0}', space=vmem, size = 0x1d000, scoped, tag = 'output window, operand 0, single buffered']
    #allocation3 [shape = 's32[1]{0}', space=sflag, size = 0x4, scoped, tag = 'scoped memory for _vae_forward_impl.1']
    %10 = vsyncpa [#allocation3], 0
    // Predicated region
    $region2: #{_vae_forward_impl.1} parent=1 // pred_check
      _
    $region3: #{_vae_forward_impl.1} parent=1 // pred_check_branch
      %12 = sbr.rel (0) target = $region5
    $region4: #{_vae_forward_impl.1} parent=1 // pred_region
      _
    $region5: #{_vae_forward_impl.1} parent=1 // pred_fallthru
      _
    // Predicated region
    $region6: #{_vae_forward_impl.1} parent=1 // pred_check
      _
    $region7: #{_vae_forward_impl.1} parent=1 // pred_check_branch
      %14 = sbr.rel (0) target = $region9
    $region8: #{_vae_forward_impl.1} parent=1 // pred_region
      _
    $region9: #{_vae_forward_impl.1} parent=1 // pred_fallthru
      _
    // Predicated region
    $region10: #{_vae_forward_impl.1} parent=1 // pred_check
      _
    $region11: #{_vae_forward_impl.1} parent=1 // pred_check_branch
      %16 = sbr.rel (0) target = $region13
    $region12: #{_vae_forward_impl.1} parent=1 // pred_region
      _
    $region13: #{_vae_forward_impl.1} parent=1 // pred_fallthru
      _
    // Predicated region
    $region14: #{_vae_forward_impl.1} parent=1 // pred_check
      _
    $region15: #{_vae_forward_impl.1} parent=1 // pred_check_branch
      %18 = sbr.rel (0) target = $region17
    $region16: #{_vae_forward_impl.1} parent=1 // pred_region
      _
    $region17: #{_vae_forward_impl.1} parent=1 // pred_fallthru
      _
    // Predicated region
    $region18: #{_vae_forward_impl.1} parent=1 // pred_check
      _
    $region19: #{_vae_forward_impl.1} parent=1 // pred_check_branch
      %20 = sbr.rel (0) target = $region21
    $region20: #{_vae_forward_impl.1} parent=1 // pred_region
      _
    $region21: #{_vae_forward_impl.1} parent=1 // pred_fallthru
      _
    %v21 = vld [vmem:[%s0] sm:$0xff]
    %v22 = vld [vmem:[%s0 + $0x8] sm:$0xff]
    %v23 = vld [vmem:[%s0 + $0x10] sm:$0xff]
    %v24 = vld [vmem:[%s0 + $0x18] sm:$0xff]
    %v25 = vld [vmem:[%s0 + $0x20] sm:$0xff]
    %v26 = vld [vmem:[%s0 + $0x28] sm:$0xff]
    %v27 = vld [vmem:[%s0 + $0x30] sm:$0xff]
    %v28 = vld [vmem:[%s0 + $0x38] sm:$0xff]
    %v29 = vld [vmem:[%s0 + $0x40] sm:$0xff]
    %v30 = vld [vmem:[%s0 + $0x48] sm:$0xff]
    %v31 = vld [vmem:[%s0 + $0x50] sm:$0xff]
    %v32 = vld [vmem:[%s0 + $0x58] sm:$0xff]
    %v33 = vld [vmem:[%s0 + $0x60] sm:$0xff]
    %v34 = vld [vmem:[%s0 + $0x68] sm:$0xff]
    %v35 = vld [vmem:[%s0 + $0x70] sm:$0xff]
    %v36 = vld [vmem:[%s0 + $0x78] sm:$0xff]
    %v37 = vld [vmem:[%s0 + $0x80] sm:$0xff]
    %v38 = vld [vmem:[%s0 + $0x88] sm:$0xff]
    %v39 = vld [vmem:[%s0 + $0x90] sm:$0xff]
    %v40 = vld [vmem:[%s0 + $0x98] sm:$0xff]
    %v41 = vld [vmem:[%s0 + $0xa0] sm:$0xff]
    %v42 = vld [vmem:[%s0 + $0xa8] sm:$0xff]
    %v43 = vld [vmem:[%s0 + $0xb0] sm:$0xff]
    %v44 = vld [vmem:[%s0 + $0xb8] sm:$0xff]
    %v45 = vld [vmem:[%s0 + $0xc0] sm:$0xff]
    %v46 = vld [vmem:[%s0 + $0xc8] sm:$0xff]
    %v47 = vld [vmem:[%s0 + $0xd0] sm:$0xff]
    %v48 = vld [vmem:[%s0 + $0xd8] sm:$0xff]
    %v49 = vld [vmem:[%s0 + $0xe0] sm:$0xff]
    %v50 = vld [vmem:[%s1] sm:$0xff]
    %v51 = vld [vmem:[%s1 + $0x8] sm:$0xff]
    %v52 = vld [vmem:[%s1 + $0x10] sm:$0xff]
    %v53 = vld [vmem:[%s1 + $0x18] sm:$0xff]
    %v54 = vld [vmem:[%s1 + $0x20] sm:$0xff]
    %v55 = vld [vmem:[%s1 + $0x28] sm:$0xff]
    %v56 = vld [vmem:[%s1 + $0x30] sm:$0xff]
    %v57 = vld [vmem:[%s1 + $0x38] sm:$0xff]
    %v58 = vld [vmem:[%s1 + $0x40] sm:$0xff]
    %v59 = vld [vmem:[%s1 + $0x48] sm:$0xff]
    %v60 = vld [vmem:[%s1 + $0x50] sm:$0xff]
    %v61 = vld [vmem:[%s1 + $0x58] sm:$0xff]
    %v62 = vld [vmem:[%s1 + $0x60] sm:$0xff]
    %v63 = vld [vmem:[%s1 + $0x68] sm:$0xff]
    %v64 = vld [vmem:[%s1 + $0x70] sm:$0xff]
    %v65 = vld [vmem:[%s1 + $0x78] sm:$0xff]
    %v66 = vld [vmem:[%s1 + $0x80] sm:$0xff]
    %v67 = vld [vmem:[%s1 + $0x88] sm:$0xff]
    %v68 = vld [vmem:[%s1 + $0x90] sm:$0xff]
    %v69 = vld [vmem:[%s1 + $0x98] sm:$0xff]
    %v70 = vld [vmem:[%s1 + $0xa0] sm:$0xff]
    %v71 = vld [vmem:[%s1 + $0xa8] sm:$0xff]
    %v72 = vld [vmem:[%s1 + $0xb0] sm:$0xff]
    %v73 = vld [vmem:[%s1 + $0xb8] sm:$0xff]
    %v74 = vld [vmem:[%s1 + $0xc0] sm:$0xff]
    %v75 = vld [vmem:[%s1 + $0xc8] sm:$0xff]
    %v76 = vld [vmem:[%s1 + $0xd0] sm:$0xff]
    %v77 = vld [vmem:[%s1 + $0xd8] sm:$0xff]
    %v78 = vld [vmem:[%s1 + $0xe0] sm:$0xff]
    %v79 = vld [vmem:[%s1 + $0xe8] sm:$0xff]
    %v80 = vld [vmem:[%s1 + $0xf0] sm:$0xff]
    %v81 = vld [vmem:[%s1 + $0xf8] sm:$0xff]
    %v82 = vld [vmem:[%s1 + $0x100] sm:$0xff]
    %v83 = vld [vmem:[%s1 + $0x108] sm:$0xff]
    %v84 = vld [vmem:[%s1 + $0x110] sm:$0xff]
    %v85 = vld [vmem:[%s1 + $0x118] sm:$0xff]
    %v86 = vld [vmem:[%s1 + $0x120] sm:$0xff]
    %v87 = vld [vmem:[%s1 + $0x128] sm:$0xff]
    %v88 = vld [vmem:[%s1 + $0x130] sm:$0xff]
    %v89 = vld [vmem:[%s1 + $0x138] sm:$0xff]
    %v90 = vld [vmem:[%s1 + $0x140] sm:$0xff]
    %v91 = vld [vmem:[%s1 + $0x148] sm:$0xff]
    %v92 = vld [vmem:[%s1 + $0x150] sm:$0xff]
    %v93 = vld [vmem:[%s1 + $0x158] sm:$0xff]
    %v94 = vld [vmem:[%s1 + $0x160] sm:$0xff]
    %v95 = vld [vmem:[%s1 + $0x168] sm:$0xff]
    %v96 = vld [vmem:[%s1 + $0x170] sm:$0xff]
    %v97 = vld [vmem:[%s1 + $0x178] sm:$0xff]
    %v98 = vld [vmem:[%s1 + $0x180] sm:$0xff]
    %v99 = vld [vmem:[%s1 + $0x188] sm:$0xff]
    %v100 = vld [vmem:[%s1 + $0x190] sm:$0xff]
    %v101 = vld [vmem:[%s1 + $0x198] sm:$0xff]
    %v102 = vld [vmem:[%s1 + $0x1a0] sm:$0xff]
    %v103 = vld [vmem:[%s1 + $0x1a8] sm:$0xff]
    %v104 = vld [vmem:[%s1 + $0x1b0] sm:$0xff]
    %v105 = vld [vmem:[%s1 + $0x1b8] sm:$0xff]
    %v106 = vld [vmem:[%s1 + $0x1c0] sm:$0xff]
    %v107 = vld [vmem:[%s1 + $0x1c8] sm:$0xff]
    %v108 = vld [vmem:[%s1 + $0x1d0] sm:$0xff]
    %v109 = vld [vmem:[%s1 + $0x1d8] sm:$0xff]
    %v110 = vld [vmem:[%s1 + $0x1e0] sm:$0xff]
    %v111 = vld [vmem:[%s1 + $0x1e8] sm:$0xff]
    %v112 = vld [vmem:[%s1 + $0x1f0] sm:$0xff]
    %v113 = vld [vmem:[%s1 + $0x1f8] sm:$0xff]
    %v114 = vld [vmem:[%s1 + $0x200] sm:$0xff]
    %v115 = vld [vmem:[%s1 + $0x208] sm:$0xff]
    %v116 = vld [vmem:[%s1 + $0x210] sm:$0xff]
    %v117 = vld [vmem:[%s1 + $0x218] sm:$0xff]
    %v118 = vld [vmem:[%s1 + $0x220] sm:$0xff]
    %v119 = vld [vmem:[%s1 + $0x228] sm:$0xff]
    %v120 = vld [vmem:[%s1 + $0x230] sm:$0xff]
    %v121 = vld [vmem:[%s1 + $0x238] sm:$0xff]
    %v122 = vld [vmem:[%s1 + $0x240] sm:$0xff]
    %v123 = vld [vmem:[%s1 + $0x248] sm:$0xff]
    %v124 = vld [vmem:[%s1 + $0x250] sm:$0xff]
    %v125 = vld [vmem:[%s1 + $0x258] sm:$0xff]
    %v126 = vld [vmem:[%s1 + $0x260] sm:$0xff]
    %v127 = vld [vmem:[%s1 + $0x268] sm:$0xff]
    %v128 = vld [vmem:[%s1 + $0x270] sm:$0xff]
    %v129 = vld [vmem:[%s1 + $0x278] sm:$0xff]
    %v130 = vld [vmem:[%s1 + $0x280] sm:$0xff]
    %v131 = vld [vmem:[%s1 + $0x288] sm:$0xff]
    %v132 = vld [vmem:[%s1 + $0x290] sm:$0xff]
    %v133 = vld [vmem:[%s1 + $0x298] sm:$0xff]
    %v134 = vld [vmem:[%s1 + $0x2a0] sm:$0xff]
    %v135 = vld [vmem:[%s1 + $0x2a8] sm:$0xff]
    %v136 = vld [vmem:[%s1 + $0x2b0] sm:$0xff]
    %v137 = vld [vmem:[%s1 + $0x2b8] sm:$0xff]
    %v138 = vld [vmem:[%s1 + $0x2c0] sm:$0xff]
    %v139 = vld [vmem:[%s1 + $0x2c8] sm:$0xff]
    %v140 = vld [vmem:[%s1 + $0x2d0] sm:$0xff]
    %v141 = vld [vmem:[%s1 + $0x2d8] sm:$0xff]
    %v142 = vld [vmem:[%s1 + $0x2e0] sm:$0xff]
    %v143 = vld [vmem:[%s1 + $0x2e8] sm:$0xff]
    %v144 = vld [vmem:[%s1 + $0x2f0] sm:$0xff]
    %v145 = vld [vmem:[%s1 + $0x2f8] sm:$0xff]
    %v146 = vld [vmem:[%s1 + $0x300] sm:$0xff]
    %v147 = vld [vmem:[%s1 + $0x308] sm:$0xff]
    %v148 = vld [vmem:[%s1 + $0x310] sm:$0xff]
    %v149 = vld [vmem:[%s1 + $0x318] sm:$0xff]
    %v150 = vld [vmem:[%s1 + $0x320] sm:$0xff]
    %v151 = vld [vmem:[%s1 + $0x328] sm:$0xff]
    %v152 = vld [vmem:[%s1 + $0x330] sm:$0xff]
    %v153 = vld [vmem:[%s1 + $0x338] sm:$0xff]
    %v154 = vld [vmem:[%s1 + $0x340] sm:$0xff]
    %v155 = vld [vmem:[%s1 + $0x348] sm:$0xff]
    %v156 = vld [vmem:[%s1 + $0x350] sm:$0xff]
    %v157 = vld [vmem:[%s1 + $0x358] sm:$0xff]
    %v158 = vld [vmem:[%s1 + $0x360] sm:$0xff]
    %v159 = vld [vmem:[%s1 + $0x368] sm:$0xff]
    %v160 = vld [vmem:[%s1 + $0x370] sm:$0xff]
    %v161 = vld [vmem:[%s1 + $0x378] sm:$0xff]
    %v162 = vld [vmem:[%s1 + $0x380] sm:$0xff]
    %v163 = vld [vmem:[%s1 + $0x388] sm:$0xff]
    %v164 = vld [vmem:[%s1 + $0x390] sm:$0xff]
    %v165 = vld [vmem:[%s1 + $0x398] sm:$0xff]
    %v166 = vld [vmem:[%s1 + $0x3a0] sm:$0xff]
    %v167 = vld [vmem:[%s1 + $0x3a8] sm:$0xff]
    %v168 = vld [vmem:[%s1 + $0x3b0] sm:$0xff]
    %v169 = vld [vmem:[%s1 + $0x3b8] sm:$0xff]
    %v170 = vld [vmem:[%s1 + $0x3c0] sm:$0xff]
    %v171 = vld [vmem:[%s1 + $0x3c8] sm:$0xff]
    %v172 = vld [vmem:[%s1 + $0x3d0] sm:$0xff]
    %v173 = vld [vmem:[%s1 + $0x3d8] sm:$0xff]
    %v174 = vld [vmem:[%s1 + $0x3e0] sm:$0xff]
    %v175 = vld [vmem:[%s1 + $0x3e8] sm:$0xff]
    %v176 = vld [vmem:[%s1 + $0x3f0] sm:$0xff]
    %v177 = vld [vmem:[%s1 + $0x3f8] sm:$0xff]
    %v178 = vld [vmem:[%s1 + $0x400] sm:$0xff]
    %v179 = vld [vmem:[%s1 + $0x408] sm:$0xff]
    %v180 = vld [vmem:[%s1 + $0x410] sm:$0xff]
    %v181 = vld [vmem:[%s1 + $0x418] sm:$0xff]
    %v182 = vld [vmem:[%s1 + $0x420] sm:$0xff]
    %v183 = vld [vmem:[%s1 + $0x428] sm:$0xff]
    %v184 = vld [vmem:[%s1 + $0x430] sm:$0xff]
    %v185 = vld [vmem:[%s1 + $0x438] sm:$0xff]
    %v186 = vld [vmem:[%s1 + $0x440] sm:$0xff]
    %v187 = vld [vmem:[%s1 + $0x448] sm:$0xff]
    %v188 = vld [vmem:[%s1 + $0x450] sm:$0xff]
    %v189 = vld [vmem:[%s1 + $0x458] sm:$0xff]
    %v190 = vld [vmem:[%s1 + $0x460] sm:$0xff]
    %v191 = vld [vmem:[%s1 + $0x468] sm:$0xff]
    %v192 = vld [vmem:[%s1 + $0x470] sm:$0xff]
    %v193 = vld [vmem:[%s1 + $0x478] sm:$0xff]
    %v194 = vld [vmem:[%s1 + $0x480] sm:$0xff]
    %v195 = vld [vmem:[%s1 + $0x488] sm:$0xff]
    %v196 = vld [vmem:[%s1 + $0x490] sm:$0xff]
    %v197 = vld [vmem:[%s1 + $0x498] sm:$0xff]
    %v198 = vld [vmem:[%s1 + $0x4a0] sm:$0xff]
    %v199 = vld [vmem:[%s1 + $0x4a8] sm:$0xff]
    %v200 = vld [vmem:[%s1 + $0x4b0] sm:$0xff]
    %v201 = vld [vmem:[%s1 + $0x4b8] sm:$0xff]
    %v202 = vld [vmem:[%s1 + $0x4c0] sm:$0xff]
    %v203 = vld [vmem:[%s1 + $0x4c8] sm:$0xff]
    %v204 = vld [vmem:[%s1 + $0x4d0] sm:$0xff]
    %v205 = vld [vmem:[%s1 + $0x4d8] sm:$0xff]
    %v206 = vld [vmem:[%s1 + $0x4e0] sm:$0xff]
    %v207 = vld [vmem:[%s1 + $0x4e8] sm:$0xff]
    %v208 = vld [vmem:[%s1 + $0x4f0] sm:$0xff]
    %v209 = vld [vmem:[%s1 + $0x4f8] sm:$0xff]
    %v210 = vld [vmem:[%s1 + $0x500] sm:$0xff]
    %v211 = vld [vmem:[%s1 + $0x508] sm:$0xff]
    %v212 = vld [vmem:[%s1 + $0x510] sm:$0xff]
    %v213 = vld [vmem:[%s1 + $0x518] sm:$0xff]
    %v214 = vld [vmem:[%s1 + $0x520] sm:$0xff]
    %v215 = vld [vmem:[%s1 + $0x528] sm:$0xff]
    %v216 = vld [vmem:[%s1 + $0x530] sm:$0xff]
    %v217 = vld [vmem:[%s1 + $0x538] sm:$0xff]
    %v218 = vld [vmem:[%s1 + $0x540] sm:$0xff]
    %v219 = vld [vmem:[%s1 + $0x548] sm:$0xff]
    %v220 = vld [vmem:[%s1 + $0x550] sm:$0xff]
    %v221 = vld [vmem:[%s1 + $0x558] sm:$0xff]
    %v222 = vld [vmem:[%s1 + $0x560] sm:$0xff]
    %v223 = vld [vmem:[%s1 + $0x568] sm:$0xff]
    %v224 = vld [vmem:[%s1 + $0x570] sm:$0xff]
    %v225 = vld [vmem:[%s1 + $0x578] sm:$0xff]
    %v226 = vld [vmem:[%s1 + $0x580] sm:$0xff]
    %v227 = vld [vmem:[%s1 + $0x588] sm:$0xff]
    %v228 = vld [vmem:[%s1 + $0x590] sm:$0xff]
    %v229 = vld [vmem:[%s1 + $0x598] sm:$0xff]
    %v230 = vld [vmem:[%s1 + $0x5a0] sm:$0xff]
    %v231 = vld [vmem:[%s1 + $0x5a8] sm:$0xff]
    %v232 = vld [vmem:[%s1 + $0x5b0] sm:$0xff]
    %v233 = vld [vmem:[%s1 + $0x5b8] sm:$0xff]
    %v234 = vld [vmem:[%s1 + $0x5c0] sm:$0xff]
    %v235 = vld [vmem:[%s1 + $0x5c8] sm:$0xff]
    %v236 = vld [vmem:[%s1 + $0x5d0] sm:$0xff]
    %v237 = vld [vmem:[%s1 + $0x5d8] sm:$0xff]
    %v238 = vld [vmem:[%s1 + $0x5e0] sm:$0xff]
    %v239 = vld [vmem:[%s1 + $0x5e8] sm:$0xff]
    %v240 = vld [vmem:[%s1 + $0x5f0] sm:$0xff]
    %v241 = vld [vmem:[%s1 + $0x5f8] sm:$0xff]
    %v242 = vld [vmem:[%s1 + $0x600] sm:$0xff]
    %v243 = vld [vmem:[%s1 + $0x608] sm:$0xff]
    %v244 = vld [vmem:[%s1 + $0x610] sm:$0xff]
    %v245 = vld [vmem:[%s1 + $0x618] sm:$0xff]
    %v246 = vld [vmem:[%s1 + $0x620] sm:$0xff]
    %v247 = vld [vmem:[%s1 + $0x628] sm:$0xff]
    %v248 = vld [vmem:[%s1 + $0x630] sm:$0xff]
    %v249 = vld [vmem:[%s1 + $0x638] sm:$0xff]
    %v250 = vld [vmem:[%s1 + $0x640] sm:$0xff]
    %v251 = vld [vmem:[%s1 + $0x648] sm:$0xff]
    %v252 = vld [vmem:[%s1 + $0x650] sm:$0xff]
    %v253 = vld [vmem:[%s1 + $0x658] sm:$0xff]
    %v254 = vld [vmem:[%s1 + $0x660] sm:$0xff]
    %v255 = vld [vmem:[%s1 + $0x668] sm:$0xff]
    %v256 = vld [vmem:[%s1 + $0x670] sm:$0xff]
    %v257 = vld [vmem:[%s1 + $0x678] sm:$0xff]
    %v258 = vld [vmem:[%s1 + $0x680] sm:$0xff]
    %v259 = vld [vmem:[%s1 + $0x688] sm:$0xff]
    %v260 = vld [vmem:[%s1 + $0x690] sm:$0xff]
    %v261 = vld [vmem:[%s1 + $0x698] sm:$0xff]
    %v262 = vld [vmem:[%s1 + $0x6a0] sm:$0xff]
    %v263 = vld [vmem:[%s1 + $0x6a8] sm:$0xff]
    %v264 = vld [vmem:[%s1 + $0x6b0] sm:$0xff]
    %v265 = vld [vmem:[%s1 + $0x6b8] sm:$0xff]
    %v266 = vld [vmem:[%s1 + $0x6c0] sm:$0xff]
    %v267 = vld [vmem:[%s1 + $0x6c8] sm:$0xff]
    %v268 = vld [vmem:[%s1 + $0x6d0] sm:$0xff]
    %v269 = vld [vmem:[%s1 + $0x6d8] sm:$0xff]
    %v270 = vld [vmem:[%s1 + $0x6e0] sm:$0xff]
    %v271 = vld [vmem:[%s1 + $0x6e8] sm:$0xff]
    %v272 = vld [vmem:[%s1 + $0x6f0] sm:$0xff]
    %v273 = vld [vmem:[%s1 + $0x6f8] sm:$0xff]
    %v274 = vld [vmem:[%s1 + $0x700] sm:$0xff]
    %v275 = vld [vmem:[%s1 + $0x708] sm:$0xff]
    %v276 = vld [vmem:[%s1 + $0x710] sm:$0xff]
    %v277 = vld [vmem:[%s1 + $0x718] sm:$0xff]
    %v278 = vld [vmem:[%s1 + $0x720] sm:$0xff]
    %v279 = vld [vmem:[%s1 + $0x728] sm:$0xff]
    %v280 = vld [vmem:[%s1 + $0x730] sm:$0xff]
    %v281 = vld [vmem:[%s1 + $0x738] sm:$0xff]
    %v282 = vld [vmem:[%s1 + $0x740] sm:$0xff]
    %v283 = vld [vmem:[%s1 + $0x748] sm:$0xff]
    %v284 = vld [vmem:[%s1 + $0x750] sm:$0xff]
    %v285 = vld [vmem:[%s1 + $0x758] sm:$0xff]
    %v286 = vld [vmem:[%s1 + $0x760] sm:$0xff]
    %v287 = vld [vmem:[%s1 + $0x768] sm:$0xff]
    %v288 = vld [vmem:[%s1 + $0x770] sm:$0xff]
    %v289 = vld [vmem:[%s1 + $0x778] sm:$0xff]
    %v290 = vld [vmem:[%s1 + $0x780] sm:$0xff]
    %v291 = vld [vmem:[%s1 + $0x788] sm:$0xff]
    %v292 = vld [vmem:[%s1 + $0x790] sm:$0xff]
    %v293 = vld [vmem:[%s1 + $0x798] sm:$0xff]
    %v294 = vld [vmem:[%s1 + $0x7a0] sm:$0xff]
    %v295 = vld [vmem:[%s1 + $0x7a8] sm:$0xff]
    %v296 = vld [vmem:[%s1 + $0x7b0] sm:$0xff]
    %v297 = vld [vmem:[%s1 + $0x7b8] sm:$0xff]
    %v298 = vld [vmem:[%s1 + $0x7c0] sm:$0xff]
    %v299 = vld [vmem:[%s1 + $0x7c8] sm:$0xff]
    %v300 = vld [vmem:[%s1 + $0x7d0] sm:$0xff]
    %v301 = vld [vmem:[%s1 + $0x7d8] sm:$0xff]
    %v302 = vld [vmem:[%s1 + $0x7e0] sm:$0xff]
    %v303 = vld [vmem:[%s1 + $0x7e8] sm:$0xff]
    %v304 = vld [vmem:[%s1 + $0x7f0] sm:$0xff]
    %v305 = vld [vmem:[%s1 + $0x7f8] sm:$0xff]
    %v306 = vld [vmem:[%s1 + $0x800] sm:$0xff]
    %v307 = vld [vmem:[%s1 + $0x808] sm:$0xff]
    %v308 = vld [vmem:[%s1 + $0x810] sm:$0xff]
    %v309 = vld [vmem:[%s1 + $0x818] sm:$0xff]
    %v310 = vld [vmem:[%s1 + $0x820] sm:$0xff]
    %v311 = vld [vmem:[%s1 + $0x828] sm:$0xff]
    %v312 = vld [vmem:[%s1 + $0x830] sm:$0xff]
    %v313 = vld [vmem:[%s1 + $0x838] sm:$0xff]
    %v314 = vld [vmem:[%s1 + $0x840] sm:$0xff]
    %v315 = vld [vmem:[%s1 + $0x848] sm:$0xff]
    %v316 = vld [vmem:[%s1 + $0x850] sm:$0xff]
    %v317 = vld [vmem:[%s1 + $0x858] sm:$0xff]
    %v318 = vld [vmem:[%s1 + $0x860] sm:$0xff]
    %v319 = vld [vmem:[%s1 + $0x868] sm:$0xff]
    %v320 = vld [vmem:[%s1 + $0x870] sm:$0xff]
    %v321 = vld [vmem:[%s1 + $0x878] sm:$0xff]
    %v322 = vld [vmem:[%s1 + $0x880] sm:$0xff]
    %v323 = vld [vmem:[%s1 + $0x888] sm:$0xff]
    %v324 = vld [vmem:[%s1 + $0x890] sm:$0xff]
    %v325 = vld [vmem:[%s1 + $0x898] sm:$0xff]
    %v326 = vld [vmem:[%s1 + $0x8a0] sm:$0xff]
    %v327 = vld [vmem:[%s1 + $0x8a8] sm:$0xff]
    %v328 = vld [vmem:[%s1 + $0x8b0] sm:$0xff]
    %v329 = vld [vmem:[%s1 + $0x8b8] sm:$0xff]
    %v330 = vld [vmem:[%s1 + $0x8c0] sm:$0xff]
    %v331 = vld [vmem:[%s1 + $0x8c8] sm:$0xff]
    %v332 = vld [vmem:[%s1 + $0x8d0] sm:$0xff]
    %v333 = vld [vmem:[%s1 + $0x8d8] sm:$0xff]
    %v334 = vld [vmem:[%s1 + $0x8e0] sm:$0xff]
    %v335 = vld [vmem:[%s1 + $0x8e8] sm:$0xff]
    %v336 = vld [vmem:[%s1 + $0x8f0] sm:$0xff]
    %v337 = vld [vmem:[%s1 + $0x8f8] sm:$0xff]
    %v338 = vld [vmem:[%s1 + $0x900] sm:$0xff]
    %v339 = vld [vmem:[%s1 + $0x908] sm:$0xff]
    %v340 = vld [vmem:[%s1 + $0x910] sm:$0xff]
    %v341 = vld [vmem:[%s1 + $0x918] sm:$0xff]
    %v342 = vld [vmem:[%s1 + $0x920] sm:$0xff]
    %v343 = vld [vmem:[%s1 + $0x928] sm:$0xff]
    %v344 = vld [vmem:[%s1 + $0x930] sm:$0xff]
    %v345 = vld [vmem:[%s1 + $0x938] sm:$0xff]
    %v346 = vld [vmem:[%s1 + $0x940] sm:$0xff]
    %v347 = vld [vmem:[%s1 + $0x948] sm:$0xff]
    %v348 = vld [vmem:[%s1 + $0x950] sm:$0xff]
    %v349 = vld [vmem:[%s1 + $0x958] sm:$0xff]
    %v350 = vld [vmem:[%s1 + $0x960] sm:$0xff]
    %v351 = vld [vmem:[%s1 + $0x968] sm:$0xff]
    %v352 = vld [vmem:[%s1 + $0x970] sm:$0xff]
    %v353 = vld [vmem:[%s1 + $0x978] sm:$0xff]
    %v354 = vld [vmem:[%s1 + $0x980] sm:$0xff]
    %v355 = vld [vmem:[%s1 + $0x988] sm:$0xff]
    %v356 = vld [vmem:[%s1 + $0x990] sm:$0xff]
    %v357 = vld [vmem:[%s1 + $0x998] sm:$0xff]
    %v358 = vld [vmem:[%s1 + $0x9a0] sm:$0xff]
    %v359 = vld [vmem:[%s1 + $0x9a8] sm:$0xff]
    %v360 = vld [vmem:[%s1 + $0x9b0] sm:$0xff]
    %v361 = vld [vmem:[%s1 + $0x9b8] sm:$0xff]
    %v362 = vld [vmem:[%s1 + $0x9c0] sm:$0xff]
    %v363 = vld [vmem:[%s1 + $0x9c8] sm:$0xff]
    %v364 = vld [vmem:[%s1 + $0x9d0] sm:$0xff]
    %v365 = vld [vmem:[%s1 + $0x9d8] sm:$0xff]
    %v366 = vld [vmem:[%s1 + $0x9e0] sm:$0xff]
    %v367 = vld [vmem:[%s1 + $0x9e8] sm:$0xff]
    %v368 = vld [vmem:[%s1 + $0x9f0] sm:$0xff]
    %v369 = vld [vmem:[%s1 + $0x9f8] sm:$0xff]
    %v370 = vld [vmem:[%s1 + $0xa00] sm:$0xff]
    %v371 = vld [vmem:[%s1 + $0xa08] sm:$0xff]
    %v372 = vld [vmem:[%s1 + $0xa10] sm:$0xff]
    %v373 = vld [vmem:[%s1 + $0xa18] sm:$0xff]
    %v374 = vld [vmem:[%s1 + $0xa20] sm:$0xff]
    %v375 = vld [vmem:[%s1 + $0xa28] sm:$0xff]
    %v376 = vld [vmem:[%s1 + $0xa30] sm:$0xff]
    %v377 = vld [vmem:[%s1 + $0xa38] sm:$0xff]
    %v378 = vld [vmem:[%s1 + $0xa40] sm:$0xff]
    %v379 = vld [vmem:[%s1 + $0xa48] sm:$0xff]
    %v380 = vld [vmem:[%s1 + $0xa50] sm:$0xff]
    %v381 = vld [vmem:[%s1 + $0xa58] sm:$0xff]
    %v382 = vld [vmem:[%s1 + $0xa60] sm:$0xff]
    %v383 = vld [vmem:[%s1 + $0xa68] sm:$0xff]
    %v384 = vld [vmem:[%s1 + $0xa70] sm:$0xff]
    %v385 = vld [vmem:[%s1 + $0xa78] sm:$0xff]
    %v386 = vld [vmem:[%s1 + $0xa80] sm:$0xff]
    %v387 = vld [vmem:[%s1 + $0xa88] sm:$0xff]
    %v388 = vld [vmem:[%s1 + $0xa90] sm:$0xff]
    %v389 = vld [vmem:[%s1 + $0xa98] sm:$0xff]
    %v390 = vld [vmem:[%s1 + $0xaa0] sm:$0xff]
    %v391 = vld [vmem:[%s1 + $0xaa8] sm:$0xff]
    %v392 = vld [vmem:[%s1 + $0xab0] sm:$0xff]
    %v393 = vld [vmem:[%s1 + $0xab8] sm:$0xff]
    %v394 = vld [vmem:[%s1 + $0xac0] sm:$0xff]
    %v395 = vld [vmem:[%s1 + $0xac8] sm:$0xff]
    %v396 = vld [vmem:[%s1 + $0xad0] sm:$0xff]
    %v397 = vld [vmem:[%s1 + $0xad8] sm:$0xff]
    %v398 = vld [vmem:[%s1 + $0xae0] sm:$0xff]
    %v399 = vld [vmem:[%s1 + $0xae8] sm:$0xff]
    %v400 = vld [vmem:[%s1 + $0xaf0] sm:$0xff]
    %v401 = vld [vmem:[%s1 + $0xaf8] sm:$0xff]
    %v402 = vld [vmem:[%s1 + $0xb00] sm:$0xff]
    %v403 = vld [vmem:[%s1 + $0xb08] sm:$0xff]
    %v404 = vld [vmem:[%s1 + $0xb10] sm:$0xff]
    %v405 = vld [vmem:[%s1 + $0xb18] sm:$0xff]
    %v406 = vld [vmem:[%s1 + $0xb20] sm:$0xff]
    %v407 = vld [vmem:[%s1 + $0xb28] sm:$0xff]
    %v408 = vld [vmem:[%s1 + $0xb30] sm:$0xff]
    %v409 = vld [vmem:[%s1 + $0xb38] sm:$0xff]
    %v410 = vld [vmem:[%s1 + $0xb40] sm:$0xff]
    %v411 = vld [vmem:[%s1 + $0xb48] sm:$0xff]
    %v412 = vld [vmem:[%s1 + $0xb50] sm:$0xff]
    %v413 = vld [vmem:[%s1 + $0xb58] sm:$0xff]
    %v414 = vld [vmem:[%s1 + $0xb60] sm:$0xff]
    %v415 = vld [vmem:[%s1 + $0xb68] sm:$0xff]
    %v416 = vld [vmem:[%s1 + $0xb70] sm:$0xff]
    %v417 = vld [vmem:[%s1 + $0xb78] sm:$0xff]
    %v418 = vld [vmem:[%s1 + $0xb80] sm:$0xff]
    %v419 = vld [vmem:[%s1 + $0xb88] sm:$0xff]
    %v420 = vld [vmem:[%s1 + $0xb90] sm:$0xff]
    %v421 = vld [vmem:[%s1 + $0xb98] sm:$0xff]
    %v422 = vld [vmem:[%s1 + $0xba0] sm:$0xff]
    %v423 = vld [vmem:[%s1 + $0xba8] sm:$0xff]
    %v424 = vld [vmem:[%s1 + $0xbb0] sm:$0xff]
    %v425 = vld [vmem:[%s1 + $0xbb8] sm:$0xff]
    %v426 = vld [vmem:[%s1 + $0xbc0] sm:$0xff]
    %v427 = vld [vmem:[%s1 + $0xbc8] sm:$0xff]
    %v428 = vld [vmem:[%s1 + $0xbd0] sm:$0xff]
    %v429 = vld [vmem:[%s1 + $0xbd8] sm:$0xff]
    %v430 = vld [vmem:[%s1 + $0xbe0] sm:$0xff]
    %v431 = vld [vmem:[%s1 + $0xbe8] sm:$0xff]
    %v432 = vld [vmem:[%s1 + $0xbf0] sm:$0xff]
    %v433 = vld [vmem:[%s1 + $0xbf8] sm:$0xff]
    %v434 = vld [vmem:[%s1 + $0xc00] sm:$0xff]
    %v435 = vld [vmem:[%s1 + $0xc08] sm:$0xff]
    %v436 = vld [vmem:[%s1 + $0xc10] sm:$0xff]
    %v437 = vld [vmem:[%s1 + $0xc18] sm:$0xff]
    %v438 = vld [vmem:[%s1 + $0xc20] sm:$0xff]
    %v439 = vld [vmem:[%s1 + $0xc28] sm:$0xff]
    %v440 = vld [vmem:[%s1 + $0xc30] sm:$0xff]
    %v441 = vld [vmem:[%s1 + $0xc38] sm:$0xff]
    %v442 = vld [vmem:[%s1 + $0xc40] sm:$0xff]
    %v443 = vld [vmem:[%s1 + $0xc48] sm:$0xff]
    %v444 = vld [vmem:[%s1 + $0xc50] sm:$0xff]
    %v445 = vld [vmem:[%s1 + $0xc58] sm:$0xff]
    %v446 = vld [vmem:[%s1 + $0xc60] sm:$0xff]
    %v447 = vld [vmem:[%s1 + $0xc68] sm:$0xff]
    %v448 = vld [vmem:[%s1 + $0xc70] sm:$0xff]
    %v449 = vld [vmem:[%s1 + $0xc78] sm:$0xff]
    %v450 = vld [vmem:[%s1 + $0xc80] sm:$0xff]
    %v451 = vld [vmem:[%s1 + $0xc88] sm:$0xff]
    %v452 = vld [vmem:[%s1 + $0xc90] sm:$0xff]
    %v453 = vld [vmem:[%s1 + $0xc98] sm:$0xff]
    %v454 = vld [vmem:[%s1 + $0xca0] sm:$0xff]
    %v455 = vld [vmem:[%s1 + $0xca8] sm:$0xff]
    %v456 = vld [vmem:[%s1 + $0xcb0] sm:$0xff]
    %v457 = vld [vmem:[%s1 + $0xcb8] sm:$0xff]
    %v458 = vld [vmem:[%s1 + $0xcc0] sm:$0xff]
    %v459 = vld [vmem:[%s1 + $0xcc8] sm:$0xff]
    %v460 = vld [vmem:[%s1 + $0xcd0] sm:$0xff]
    %v461 = vld [vmem:[%s1 + $0xcd8] sm:$0xff]
    %v462 = vld [vmem:[%s1 + $0xce0] sm:$0xff]
    %v463 = vld [vmem:[%s1 + $0xce8] sm:$0xff]
    %v464 = vld [vmem:[%s1 + $0xcf0] sm:$0xff]
    %v465 = vld [vmem:[%s1 + $0xcf8] sm:$0xff]
    %v466 = vld [vmem:[%s1 + $0xd00] sm:$0xff]
    %v467 = vld [vmem:[%s1 + $0xd08] sm:$0xff]
    %v468 = vld [vmem:[%s1 + $0xd10] sm:$0xff]
    %v469 = vld [vmem:[%s1 + $0xd18] sm:$0xff]
    %v470 = vld [vmem:[%s1 + $0xd20] sm:$0xff]
    %v471 = vld [vmem:[%s1 + $0xd28] sm:$0xff]
    %v472 = vld [vmem:[%s1 + $0xd30] sm:$0xff]
    %v473 = vld [vmem:[%s1 + $0xd38] sm:$0xff]
    %v474 = vld [vmem:[%s1 + $0xd40] sm:$0xff]
    %v475 = vld [vmem:[%s1 + $0xd48] sm:$0xff]
    %v476 = vld [vmem:[%s1 + $0xd50] sm:$0xff]
    %v477 = vld [vmem:[%s1 + $0xd58] sm:$0xff]
    %v478 = vld [vmem:[%s1 + $0xd60] sm:$0xff]
    %v479 = vld [vmem:[%s1 + $0xd68] sm:$0xff]
    %v480 = vld [vmem:[%s1 + $0xd70] sm:$0xff]
    %v481 = vld [vmem:[%s1 + $0xd78] sm:$0xff]
    %v482 = vld [vmem:[%s1 + $0xd80] sm:$0xff]
    %v483 = vld [vmem:[%s1 + $0xd88] sm:$0xff]
    %v484 = vld [vmem:[%s1 + $0xd90] sm:$0xff]
    %v485 = vld [vmem:[%s1 + $0xd98] sm:$0xff]
    %v486 = vld [vmem:[%s1 + $0xda0] sm:$0xff]
    %v487 = vld [vmem:[%s1 + $0xda8] sm:$0xff]
    %v488 = vld [vmem:[%s1 + $0xdb0] sm:$0xff]
    %v489 = vld [vmem:[%s1 + $0xdb8] sm:$0xff]
    %v490 = vld [vmem:[%s1 + $0xdc0] sm:$0xff]
    %v491 = vld [vmem:[%s1 + $0xdc8] sm:$0xff]
    %v492 = vld [vmem:[%s1 + $0xdd0] sm:$0xff]
    %v493 = vld [vmem:[%s1 + $0xdd8] sm:$0xff]
    %v494 = vld [vmem:[%s1 + $0xde0] sm:$0xff]
    %v495 = vld [vmem:[%s1 + $0xde8] sm:$0xff]
    %v496 = vld [vmem:[%s1 + $0xdf0] sm:$0xff]
    %v497 = vld [vmem:[%s1 + $0xdf8] sm:$0xff]
    %v498 = vld [vmem:[%s1 + $0xe00] sm:$0xff]
    %v499 = vld [vmem:[%s1 + $0xe08] sm:$0xff]
    %v500 = vld [vmem:[%s1 + $0xe10] sm:$0x3f]
    %v501 = vld [vmem:[%s2] sm:$0x1]
    %v503 = vlaneseq
    %v504 = vshrl.u32 %v503, 7
    %v505 = vsub.s32 0, %v504
    %v506 = vrot.slane %v501, %v505
    %vm508 = vcmask 179200
    %v510 = vsel %vm508, %v49, 0
    %vm512 = vcmask 1045504
    %v514 = vsel %vm512, %v500, 0
    %516 = vmatprep.subr.mxu0 0.0
    %517 = vmatpush1.msra.mxu0 %v65
    %518 = vmatprep.subr.mxu0 0.0
    %519 = vmatpush1.msra.mxu0 %v64
    %520 = vmatprep.subr.mxu0 0.0
    %521 = vmatpush1.msra.mxu0 %v63
    %522 = vmatprep.subr.mxu0 0.0
    %523 = vmatpush1.msra.mxu0 %v62
    %524 = vmatprep.subr.mxu0 0.0
    %525 = vmatpush1.msra.mxu0 %v61
    %526 = vmatprep.subr.mxu0 0.0
    %527 = vmatpush1.msra.mxu0 %v60
    %528 = vmatprep.subr.mxu0 0.0
    %529 = vmatpush1.msra.mxu0 %v59
    %530 = vmatprep.subr.mxu0 0.0
    %531 = vmatpush1.msra.mxu0 %v58
    %532 = vmatprep.subr.mxu0 0.0
    %533 = vmatpush1.msra.mxu0 %v57
    %534 = vmatprep.subr.mxu0 0.0
    %535 = vmatpush1.msra.mxu0 %v56
    %536 = vmatprep.subr.mxu0 0.0
    %537 = vmatpush1.msra.mxu0 %v55
    %538 = vmatprep.subr.mxu0 0.0
    %539 = vmatpush1.msra.mxu0 %v54
    %540 = vmatprep.subr.mxu0 0.0
    %541 = vmatpush1.msra.mxu0 %v53
    %542 = vmatprep.subr.mxu0 0.0
    %543 = vmatpush1.msra.mxu0 %v52
    %544 = vmatprep.subr.mxu0 0.0
    %545 = vmatpush1.msra.mxu0 %v51
    %546 = vmatprep.subr.mxu0 0.0
    %547 = vmatpush1.msra.mxu0 %v50
    %548 = vmatprep.subr.mxu0 0.0
    %549 = vmatpush2.msra.mxu0 %v81
    %550 = vmatprep.subr.mxu0 0.0
    %551 = vmatpush2.msra.mxu0 %v80
    %552 = vmatprep.subr.mxu0 0.0
    %553 = vmatpush2.msra.mxu0 %v79
    %554 = vmatprep.subr.mxu0 0.0
    %555 = vmatpush2.msra.mxu0 %v78
    %556 = vmatprep.subr.mxu0 0.0
    %557 = vmatpush2.msra.mxu0 %v77
    %558 = vmatprep.subr.mxu0 0.0
    %559 = vmatpush2.msra.mxu0 %v76
    %560 = vmatprep.subr.mxu0 0.0
    %561 = vmatpush2.msra.mxu0 %v75
    %562 = vmatprep.subr.mxu0 0.0
    %563 = vmatpush2.msra.mxu0 %v74
    %564 = vmatprep.subr.mxu0 0.0
    %565 = vmatpush2.msra.mxu0 %v73
    %566 = vmatprep.subr.mxu0 0.0
    %567 = vmatpush2.msra.mxu0 %v72
    %568 = vmatprep.subr.mxu0 0.0
    %569 = vmatpush2.msra.mxu0 %v71
    %570 = vmatprep.subr.mxu0 0.0
    %571 = vmatpush2.msra.mxu0 %v70
    %572 = vmatprep.subr.mxu0 0.0
    %573 = vmatpush2.msra.mxu0 %v69
    %574 = vmatprep.subr.mxu0 0.0
    %575 = vmatpush2.msra.mxu0 %v68
    %576 = vmatprep.subr.mxu0 0.0
    %577 = vmatpush2.msra.mxu0 %v67
    %578 = vmatprep.subr.mxu0 0.0
    %579 = vmatpush2.msra.mxu0 %v66
    %580 = vmatprep.mubr.f32.mxu0 %v22
    %581 = vmatmul.mubr.f32.gmra.mxu0 %v21
    %v582 = vpop.f32.mrf.mxu0
    %v583 = vadd.f32 %v506, %v582
    %v584 = vpop.f32.mrf.mxu0
    %585 = vdwg.mxu0
    %586 = vmatprep.subr.mxu0 0.0
    %587 = vmatpush1.msra.mxu0 %v97
    %588 = vmatprep.subr.mxu0 0.0
    %589 = vmatpush1.msra.mxu0 %v96
    %590 = vmatprep.subr.mxu0 0.0
    %591 = vmatpush1.msra.mxu0 %v95
    %592 = vmatprep.subr.mxu0 0.0
    %593 = vmatpush1.msra.mxu0 %v94
    %594 = vmatprep.subr.mxu0 0.0
    %595 = vmatpush1.msra.mxu0 %v93
    %596 = vmatprep.subr.mxu0 0.0
    %597 = vmatpush1.msra.mxu0 %v92
    %598 = vmatprep.subr.mxu0 0.0
    %599 = vmatpush1.msra.mxu0 %v91
    %600 = vmatprep.subr.mxu0 0.0
    %601 = vmatpush1.msra.mxu0 %v90
    %602 = vmatprep.subr.mxu0 0.0
    %603 = vmatpush1.msra.mxu0 %v89
    %604 = vmatprep.subr.mxu0 0.0
    %605 = vmatpush1.msra.mxu0 %v88
    %606 = vmatprep.subr.mxu0 0.0
    %607 = vmatpush1.msra.mxu0 %v87
    %608 = vmatprep.subr.mxu0 0.0
    %609 = vmatpush1.msra.mxu0 %v86
    %610 = vmatprep.subr.mxu0 0.0
    %611 = vmatpush1.msra.mxu0 %v85
    %612 = vmatprep.subr.mxu0 0.0
    %613 = vmatpush1.msra.mxu0 %v84
    %614 = vmatprep.subr.mxu0 0.0
    %615 = vmatpush1.msra.mxu0 %v83
    %616 = vmatprep.subr.mxu0 0.0
    %617 = vmatpush1.msra.mxu0 %v82
    %618 = vmatprep.subr.mxu0 0.0
    %619 = vmatpush2.msra.mxu0 %v113
    %620 = vmatprep.subr.mxu0 0.0
    %621 = vmatpush2.msra.mxu0 %v112
    %622 = vmatprep.subr.mxu0 0.0
    %623 = vmatpush2.msra.mxu0 %v111
    %624 = vmatprep.subr.mxu0 0.0
    %625 = vmatpush2.msra.mxu0 %v110
    %626 = vmatprep.subr.mxu0 0.0
    %627 = vmatpush2.msra.mxu0 %v109
    %628 = vmatprep.subr.mxu0 0.0
    %629 = vmatpush2.msra.mxu0 %v108
    %630 = vmatprep.subr.mxu0 0.0
    %631 = vmatpush2.msra.mxu0 %v107
    %632 = vmatprep.subr.mxu0 0.0
    %633 = vmatpush2.msra.mxu0 %v106
    %634 = vmatprep.subr.mxu0 0.0
    %635 = vmatpush2.msra.mxu0 %v105
    %636 = vmatprep.subr.mxu0 0.0
    %637 = vmatpush2.msra.mxu0 %v104
    %638 = vmatprep.subr.mxu0 0.0
    %639 = vmatpush2.msra.mxu0 %v103
    %640 = vmatprep.subr.mxu0 0.0
    %641 = vmatpush2.msra.mxu0 %v102
    %642 = vmatprep.subr.mxu0 0.0
    %643 = vmatpush2.msra.mxu0 %v101
    %644 = vmatprep.subr.mxu0 0.0
    %645 = vmatpush2.msra.mxu0 %v100
    %646 = vmatprep.subr.mxu0 0.0
    %647 = vmatpush2.msra.mxu0 %v99
    %648 = vmatprep.subr.mxu0 0.0
    %649 = vmatpush2.msra.mxu0 %v98
    %650 = vmatprep.mubr.f32.mxu0 %v24
    %651 = vmatmul.mubr.f32.gmra.mxu0 %v23
    %v652 = vpop.f32.mrf.mxu0
    %v653 = vadd.f32 %v583, %v652
    %v654 = vpop.f32.mrf.mxu0
    %655 = vdwg.mxu0
    %656 = vmatprep.subr.mxu0 0.0
    %657 = vmatpush1.msra.mxu0 %v129
    %658 = vmatprep.subr.mxu0 0.0
    %659 = vmatpush1.msra.mxu0 %v128
    %660 = vmatprep.subr.mxu0 0.0
    %661 = vmatpush1.msra.mxu0 %v127
    %662 = vmatprep.subr.mxu0 0.0
    %663 = vmatpush1.msra.mxu0 %v126
    %664 = vmatprep.subr.mxu0 0.0
    %665 = vmatpush1.msra.mxu0 %v125
    %666 = vmatprep.subr.mxu0 0.0
    %667 = vmatpush1.msra.mxu0 %v124
    %668 = vmatprep.subr.mxu0 0.0
    %669 = vmatpush1.msra.mxu0 %v123
    %670 = vmatprep.subr.mxu0 0.0
    %671 = vmatpush1.msra.mxu0 %v122
    %672 = vmatprep.subr.mxu0 0.0
    %673 = vmatpush1.msra.mxu0 %v121
    %674 = vmatprep.subr.mxu0 0.0
    %675 = vmatpush1.msra.mxu0 %v120
    %676 = vmatprep.subr.mxu0 0.0
    %677 = vmatpush1.msra.mxu0 %v119
    %678 = vmatprep.subr.mxu0 0.0
    %679 = vmatpush1.msra.mxu0 %v118
    %680 = vmatprep.subr.mxu0 0.0
    %681 = vmatpush1.msra.mxu0 %v117
    %682 = vmatprep.subr.mxu0 0.0
    %683 = vmatpush1.msra.mxu0 %v116
    %684 = vmatprep.subr.mxu0 0.0
    %685 = vmatpush1.msra.mxu0 %v115
    %686 = vmatprep.subr.mxu0 0.0
    %687 = vmatpush1.msra.mxu0 %v114
    %688 = vmatprep.subr.mxu0 0.0
    %689 = vmatpush2.msra.mxu0 %v145
    %690 = vmatprep.subr.mxu0 0.0
    %691 = vmatpush2.msra.mxu0 %v144
    %692 = vmatprep.subr.mxu0 0.0
    %693 = vmatpush2.msra.mxu0 %v143
    %694 = vmatprep.subr.mxu0 0.0
    %695 = vmatpush2.msra.mxu0 %v142
    %696 = vmatprep.subr.mxu0 0.0
    %697 = vmatpush2.msra.mxu0 %v141
    %698 = vmatprep.subr.mxu0 0.0
    %699 = vmatpush2.msra.mxu0 %v140
    %700 = vmatprep.subr.mxu0 0.0
    %701 = vmatpush2.msra.mxu0 %v139
    %702 = vmatprep.subr.mxu0 0.0
    %703 = vmatpush2.msra.mxu0 %v138
    %704 = vmatprep.subr.mxu0 0.0
    %705 = vmatpush2.msra.mxu0 %v137
    %706 = vmatprep.subr.mxu0 0.0
    %707 = vmatpush2.msra.mxu0 %v136
    %708 = vmatprep.subr.mxu0 0.0
    %709 = vmatpush2.msra.mxu0 %v135
    %710 = vmatprep.subr.mxu0 0.0
    %711 = vmatpush2.msra.mxu0 %v134
    %712 = vmatprep.subr.mxu0 0.0
    %713 = vmatpush2.msra.mxu0 %v133
    %714 = vmatprep.subr.mxu0 0.0
    %715 = vmatpush2.msra.mxu0 %v132
    %716 = vmatprep.subr.mxu0 0.0
    %717 = vmatpush2.msra.mxu0 %v131
    %718 = vmatprep.subr.mxu0 0.0
    %719 = vmatpush2.msra.mxu0 %v130
    %720 = vmatprep.mubr.f32.mxu0 %v26
    %721 = vmatmul.mubr.f32.gmra.mxu0 %v25
    %v722 = vpop.f32.mrf.mxu0
    %v723 = vadd.f32 %v653, %v722
    %v724 = vpop.f32.mrf.mxu0
    %725 = vdwg.mxu0
    %726 = vmatprep.subr.mxu0 0.0
    %727 = vmatpush1.msra.mxu0 %v161
    %728 = vmatprep.subr.mxu0 0.0
    %729 = vmatpush1.msra.mxu0 %v160
    %730 = vmatprep.subr.mxu0 0.0
    %731 = vmatpush1.msra.mxu0 %v159
    %732 = vmatprep.subr.mxu0 0.0
    %733 = vmatpush1.msra.mxu0 %v158
    %734 = vmatprep.subr.mxu0 0.0
    %735 = vmatpush1.msra.mxu0 %v157
    %736 = vmatprep.subr.mxu0 0.0
    %737 = vmatpush1.msra.mxu0 %v156
    %738 = vmatprep.subr.mxu0 0.0
    %739 = vmatpush1.msra.mxu0 %v155
    %740 = vmatprep.subr.mxu0 0.0
    %741 = vmatpush1.msra.mxu0 %v154
    %742 = vmatprep.subr.mxu0 0.0
    %743 = vmatpush1.msra.mxu0 %v153
    %744 = vmatprep.subr.mxu0 0.0
    %745 = vmatpush1.msra.mxu0 %v152
    %746 = vmatprep.subr.mxu0 0.0
    %747 = vmatpush1.msra.mxu0 %v151
    %748 = vmatprep.subr.mxu0 0.0
    %749 = vmatpush1.msra.mxu0 %v150
    %750 = vmatprep.subr.mxu0 0.0
    %751 = vmatpush1.msra.mxu0 %v149
    %752 = vmatprep.subr.mxu0 0.0
    %753 = vmatpush1.msra.mxu0 %v148
    %754 = vmatprep.subr.mxu0 0.0
    %755 = vmatpush1.msra.mxu0 %v147
    %756 = vmatprep.subr.mxu0 0.0
    %757 = vmatpush1.msra.mxu0 %v146
    %758 = vmatprep.subr.mxu0 0.0
    %759 = vmatpush2.msra.mxu0 %v177
    %760 = vmatprep.subr.mxu0 0.0
    %761 = vmatpush2.msra.mxu0 %v176
    %762 = vmatprep.subr.mxu0 0.0
    %763 = vmatpush2.msra.mxu0 %v175
    %764 = vmatprep.subr.mxu0 0.0
    %765 = vmatpush2.msra.mxu0 %v174
    %766 = vmatprep.subr.mxu0 0.0
    %767 = vmatpush2.msra.mxu0 %v173
    %768 = vmatprep.subr.mxu0 0.0
    %769 = vmatpush2.msra.mxu0 %v172
    %770 = vmatprep.subr.mxu0 0.0
    %771 = vmatpush2.msra.mxu0 %v171
    %772 = vmatprep.subr.mxu0 0.0
    %773 = vmatpush2.msra.mxu0 %v170
    %774 = vmatprep.subr.mxu0 0.0
    %775 = vmatpush2.msra.mxu0 %v169
    %776 = vmatprep.subr.mxu0 0.0
    %777 = vmatpush2.msra.mxu0 %v168
    %778 = vmatprep.subr.mxu0 0.0
    %779 = vmatpush2.msra.mxu0 %v167
    %780 = vmatprep.subr.mxu0 0.0
    %781 = vmatpush2.msra.mxu0 %v166
    %782 = vmatprep.subr.mxu0 0.0
    %783 = vmatpush2.msra.mxu0 %v165
    %784 = vmatprep.subr.mxu0 0.0
    %785 = vmatpush2.msra.mxu0 %v164
    %786 = vmatprep.subr.mxu0 0.0
    %787 = vmatpush2.msra.mxu0 %v163
    %788 = vmatprep.subr.mxu0 0.0
    %789 = vmatpush2.msra.mxu0 %v162
    %790 = vmatprep.mubr.f32.mxu0 %v28
    %791 = vmatmul.mubr.f32.gmra.mxu0 %v27
    %v792 = vpop.f32.mrf.mxu0
    %v793 = vadd.f32 %v723, %v792
    %v794 = vpop.f32.mrf.mxu0
    %795 = vdwg.mxu0
    %796 = vmatprep.subr.mxu0 0.0
    %797 = vmatpush1.msra.mxu0 %v193
    %798 = vmatprep.subr.mxu0 0.0
    %799 = vmatpush1.msra.mxu0 %v192
    %800 = vmatprep.subr.mxu0 0.0
    %801 = vmatpush1.msra.mxu0 %v191
    %802 = vmatprep.subr.mxu0 0.0
    %803 = vmatpush1.msra.mxu0 %v190
    %804 = vmatprep.subr.mxu0 0.0
    %805 = vmatpush1.msra.mxu0 %v189
    %806 = vmatprep.subr.mxu0 0.0
    %807 = vmatpush1.msra.mxu0 %v188
    %808 = vmatprep.subr.mxu0 0.0
    %809 = vmatpush1.msra.mxu0 %v187
    %810 = vmatprep.subr.mxu0 0.0
    %811 = vmatpush1.msra.mxu0 %v186
    %812 = vmatprep.subr.mxu0 0.0
    %813 = vmatpush1.msra.mxu0 %v185
    %814 = vmatprep.subr.mxu0 0.0
    %815 = vmatpush1.msra.mxu0 %v184
    %816 = vmatprep.subr.mxu0 0.0
    %817 = vmatpush1.msra.mxu0 %v183
    %818 = vmatprep.subr.mxu0 0.0
    %819 = vmatpush1.msra.mxu0 %v182
    %820 = vmatprep.subr.mxu0 0.0
    %821 = vmatpush1.msra.mxu0 %v181
    %822 = vmatprep.subr.mxu0 0.0
    %823 = vmatpush1.msra.mxu0 %v180
    %824 = vmatprep.subr.mxu0 0.0
    %825 = vmatpush1.msra.mxu0 %v179
    %826 = vmatprep.subr.mxu0 0.0
    %827 = vmatpush1.msra.mxu0 %v178
    %828 = vmatprep.subr.mxu0 0.0
    %829 = vmatpush2.msra.mxu0 %v209
    %830 = vmatprep.subr.mxu0 0.0
    %831 = vmatpush2.msra.mxu0 %v208
    %832 = vmatprep.subr.mxu0 0.0
    %833 = vmatpush2.msra.mxu0 %v207
    %834 = vmatprep.subr.mxu0 0.0
    %835 = vmatpush2.msra.mxu0 %v206
    %836 = vmatprep.subr.mxu0 0.0
    %837 = vmatpush2.msra.mxu0 %v205
    %838 = vmatprep.subr.mxu0 0.0
    %839 = vmatpush2.msra.mxu0 %v204
    %840 = vmatprep.subr.mxu0 0.0
    %841 = vmatpush2.msra.mxu0 %v203
    %842 = vmatprep.subr.mxu0 0.0
    %843 = vmatpush2.msra.mxu0 %v202
    %844 = vmatprep.subr.mxu0 0.0
    %845 = vmatpush2.msra.mxu0 %v201
    %846 = vmatprep.subr.mxu0 0.0
    %847 = vmatpush2.msra.mxu0 %v200
    %848 = vmatprep.subr.mxu0 0.0
    %849 = vmatpush2.msra.mxu0 %v199
    %850 = vmatprep.subr.mxu0 0.0
    %851 = vmatpush2.msra.mxu0 %v198
    %852 = vmatprep.subr.mxu0 0.0
    %853 = vmatpush2.msra.mxu0 %v197
    %854 = vmatprep.subr.mxu0 0.0
    %855 = vmatpush2.msra.mxu0 %v196
    %856 = vmatprep.subr.mxu0 0.0
    %857 = vmatpush2.msra.mxu0 %v195
    %858 = vmatprep.subr.mxu0 0.0
    %859 = vmatpush2.msra.mxu0 %v194
    %860 = vmatprep.mubr.f32.mxu0 %v30
    %861 = vmatmul.mubr.f32.gmra.mxu0 %v29
    %v862 = vpop.f32.mrf.mxu0
    %v863 = vadd.f32 %v793, %v862
    %v864 = vpop.f32.mrf.mxu0
    %865 = vdwg.mxu0
    %866 = vmatprep.subr.mxu0 0.0
    %867 = vmatpush1.msra.mxu0 %v225
    %868 = vmatprep.subr.mxu0 0.0
    %869 = vmatpush1.msra.mxu0 %v224
    %870 = vmatprep.subr.mxu0 0.0
    %871 = vmatpush1.msra.mxu0 %v223
    %872 = vmatprep.subr.mxu0 0.0
    %873 = vmatpush1.msra.mxu0 %v222
    %874 = vmatprep.subr.mxu0 0.0
    %875 = vmatpush1.msra.mxu0 %v221
    %876 = vmatprep.subr.mxu0 0.0
    %877 = vmatpush1.msra.mxu0 %v220
    %878 = vmatprep.subr.mxu0 0.0
    %879 = vmatpush1.msra.mxu0 %v219
    %880 = vmatprep.subr.mxu0 0.0
    %881 = vmatpush1.msra.mxu0 %v218
    %882 = vmatprep.subr.mxu0 0.0
    %883 = vmatpush1.msra.mxu0 %v217
    %884 = vmatprep.subr.mxu0 0.0
    %885 = vmatpush1.msra.mxu0 %v216
    %886 = vmatprep.subr.mxu0 0.0
    %887 = vmatpush1.msra.mxu0 %v215
    %888 = vmatprep.subr.mxu0 0.0
    %889 = vmatpush1.msra.mxu0 %v214
    %890 = vmatprep.subr.mxu0 0.0
    %891 = vmatpush1.msra.mxu0 %v213
    %892 = vmatprep.subr.mxu0 0.0
    %893 = vmatpush1.msra.mxu0 %v212
    %894 = vmatprep.subr.mxu0 0.0
    %895 = vmatpush1.msra.mxu0 %v211
    %896 = vmatprep.subr.mxu0 0.0
    %897 = vmatpush1.msra.mxu0 %v210
    %898 = vmatprep.subr.mxu0 0.0
    %899 = vmatpush2.msra.mxu0 %v241
    %900 = vmatprep.subr.mxu0 0.0
    %901 = vmatpush2.msra.mxu0 %v240
    %902 = vmatprep.subr.mxu0 0.0
    %903 = vmatpush2.msra.mxu0 %v239
    %904 = vmatprep.subr.mxu0 0.0
    %905 = vmatpush2.msra.mxu0 %v238
    %906 = vmatprep.subr.mxu0 0.0
    %907 = vmatpush2.msra.mxu0 %v237
    %908 = vmatprep.subr.mxu0 0.0
    %909 = vmatpush2.msra.mxu0 %v236
    %910 = vmatprep.subr.mxu0 0.0
    %911 = vmatpush2.msra.mxu0 %v235
    %912 = vmatprep.subr.mxu0 0.0
    %913 = vmatpush2.msra.mxu0 %v234
    %914 = vmatprep.subr.mxu0 0.0
    %915 = vmatpush2.msra.mxu0 %v233
    %916 = vmatprep.subr.mxu0 0.0
    %917 = vmatpush2.msra.mxu0 %v232
    %918 = vmatprep.subr.mxu0 0.0
    %919 = vmatpush2.msra.mxu0 %v231
    %920 = vmatprep.subr.mxu0 0.0
    %921 = vmatpush2.msra.mxu0 %v230
    %922 = vmatprep.subr.mxu0 0.0
    %923 = vmatpush2.msra.mxu0 %v229
    %924 = vmatprep.subr.mxu0 0.0
    %925 = vmatpush2.msra.mxu0 %v228
    %926 = vmatprep.subr.mxu0 0.0
    %927 = vmatpush2.msra.mxu0 %v227
    %928 = vmatprep.subr.mxu0 0.0
    %929 = vmatpush2.msra.mxu0 %v226
    %930 = vmatprep.mubr.f32.mxu0 %v32
    %931 = vmatmul.mubr.f32.gmra.mxu0 %v31
    %v932 = vpop.f32.mrf.mxu0
    %v933 = vadd.f32 %v863, %v932
    %v934 = vpop.f32.mrf.mxu0
    %935 = vdwg.mxu0
    %936 = vmatprep.subr.mxu0 0.0
    %937 = vmatpush1.msra.mxu0 %v257
    %938 = vmatprep.subr.mxu0 0.0
    %939 = vmatpush1.msra.mxu0 %v256
    %940 = vmatprep.subr.mxu0 0.0
    %941 = vmatpush1.msra.mxu0 %v255
    %942 = vmatprep.subr.mxu0 0.0
    %943 = vmatpush1.msra.mxu0 %v254
    %944 = vmatprep.subr.mxu0 0.0
    %945 = vmatpush1.msra.mxu0 %v253
    %946 = vmatprep.subr.mxu0 0.0
    %947 = vmatpush1.msra.mxu0 %v252
    %948 = vmatprep.subr.mxu0 0.0
    %949 = vmatpush1.msra.mxu0 %v251
    %950 = vmatprep.subr.mxu0 0.0
    %951 = vmatpush1.msra.mxu0 %v250
    %952 = vmatprep.subr.mxu0 0.0
    %953 = vmatpush1.msra.mxu0 %v249
    %954 = vmatprep.subr.mxu0 0.0
    %955 = vmatpush1.msra.mxu0 %v248
    %956 = vmatprep.subr.mxu0 0.0
    %957 = vmatpush1.msra.mxu0 %v247
    %958 = vmatprep.subr.mxu0 0.0
    %959 = vmatpush1.msra.mxu0 %v246
    %960 = vmatprep.subr.mxu0 0.0
    %961 = vmatpush1.msra.mxu0 %v245
    %962 = vmatprep.subr.mxu0 0.0
    %963 = vmatpush1.msra.mxu0 %v244
    %964 = vmatprep.subr.mxu0 0.0
    %965 = vmatpush1.msra.mxu0 %v243
    %966 = vmatprep.subr.mxu0 0.0
    %967 = vmatpush1.msra.mxu0 %v242
    %968 = vmatprep.subr.mxu0 0.0
    %969 = vmatpush2.msra.mxu0 %v273
    %970 = vmatprep.subr.mxu0 0.0
    %971 = vmatpush2.msra.mxu0 %v272
    %972 = vmatprep.subr.mxu0 0.0
    %973 = vmatpush2.msra.mxu0 %v271
    %974 = vmatprep.subr.mxu0 0.0
    %975 = vmatpush2.msra.mxu0 %v270
    %976 = vmatprep.subr.mxu0 0.0
    %977 = vmatpush2.msra.mxu0 %v269
    %978 = vmatprep.subr.mxu0 0.0
    %979 = vmatpush2.msra.mxu0 %v268
    %980 = vmatprep.subr.mxu0 0.0
    %981 = vmatpush2.msra.mxu0 %v267
    %982 = vmatprep.subr.mxu0 0.0
    %983 = vmatpush2.msra.mxu0 %v266
    %984 = vmatprep.subr.mxu0 0.0
    %985 = vmatpush2.msra.mxu0 %v265
    %986 = vmatprep.subr.mxu0 0.0
    %987 = vmatpush2.msra.mxu0 %v264
    %988 = vmatprep.subr.mxu0 0.0
    %989 = vmatpush2.msra.mxu0 %v263
    %990 = vmatprep.subr.mxu0 0.0
    %991 = vmatpush2.msra.mxu0 %v262
    %992 = vmatprep.subr.mxu0 0.0
    %993 = vmatpush2.msra.mxu0 %v261
    %994 = vmatprep.subr.mxu0 0.0
    %995 = vmatpush2.msra.mxu0 %v260
    %996 = vmatprep.subr.mxu0 0.0
    %997 = vmatpush2.msra.mxu0 %v259
    %998 = vmatprep.subr.mxu0 0.0
    %999 = vmatpush2.msra.mxu0 %v258
    %1000 = vmatprep.mubr.f32.mxu0 %v34
    %1001 = vmatmul.mubr.f32.gmra.mxu0 %v33
    %v1002 = vpop.f32.mrf.mxu0
    %v1003 = vadd.f32 %v933, %v1002
    %v1004 = vpop.f32.mrf.mxu0
    %1005 = vdwg.mxu0
    %1006 = vmatprep.subr.mxu0 0.0
    %1007 = vmatpush1.msra.mxu0 %v289
    %1008 = vmatprep.subr.mxu0 0.0
    %1009 = vmatpush1.msra.mxu0 %v288
    %1010 = vmatprep.subr.mxu0 0.0
    %1011 = vmatpush1.msra.mxu0 %v287
    %1012 = vmatprep.subr.mxu0 0.0
    %1013 = vmatpush1.msra.mxu0 %v286
    %1014 = vmatprep.subr.mxu0 0.0
    %1015 = vmatpush1.msra.mxu0 %v285
    %1016 = vmatprep.subr.mxu0 0.0
    %1017 = vmatpush1.msra.mxu0 %v284
    %1018 = vmatprep.subr.mxu0 0.0
    %1019 = vmatpush1.msra.mxu0 %v283
    %1020 = vmatprep.subr.mxu0 0.0
    %1021 = vmatpush1.msra.mxu0 %v282
    %1022 = vmatprep.subr.mxu0 0.0
    %1023 = vmatpush1.msra.mxu0 %v281
    %1024 = vmatprep.subr.mxu0 0.0
    %1025 = vmatpush1.msra.mxu0 %v280
    %1026 = vmatprep.subr.mxu0 0.0
    %1027 = vmatpush1.msra.mxu0 %v279
    %1028 = vmatprep.subr.mxu0 0.0
    %1029 = vmatpush1.msra.mxu0 %v278
    %1030 = vmatprep.subr.mxu0 0.0
    %1031 = vmatpush1.msra.mxu0 %v277
    %1032 = vmatprep.subr.mxu0 0.0
    %1033 = vmatpush1.msra.mxu0 %v276
    %1034 = vmatprep.subr.mxu0 0.0
    %1035 = vmatpush1.msra.mxu0 %v275
    %1036 = vmatprep.subr.mxu0 0.0
    %1037 = vmatpush1.msra.mxu0 %v274
    %1038 = vmatprep.subr.mxu0 0.0
    %1039 = vmatpush2.msra.mxu0 %v305
    %1040 = vmatprep.subr.mxu0 0.0
    %1041 = vmatpush2.msra.mxu0 %v304
    %1042 = vmatprep.subr.mxu0 0.0
    %1043 = vmatpush2.msra.mxu0 %v303
    %1044 = vmatprep.subr.mxu0 0.0
    %1045 = vmatpush2.msra.mxu0 %v302
    %1046 = vmatprep.subr.mxu0 0.0
    %1047 = vmatpush2.msra.mxu0 %v301
    %1048 = vmatprep.subr.mxu0 0.0
    %1049 = vmatpush2.msra.mxu0 %v300
    %1050 = vmatprep.subr.mxu0 0.0
    %1051 = vmatpush2.msra.mxu0 %v299
    %1052 = vmatprep.subr.mxu0 0.0
    %1053 = vmatpush2.msra.mxu0 %v298
    %1054 = vmatprep.subr.mxu0 0.0
    %1055 = vmatpush2.msra.mxu0 %v297
    %1056 = vmatprep.subr.mxu0 0.0
    %1057 = vmatpush2.msra.mxu0 %v296
    %1058 = vmatprep.subr.mxu0 0.0
    %1059 = vmatpush2.msra.mxu0 %v295
    %1060 = vmatprep.subr.mxu0 0.0
    %1061 = vmatpush2.msra.mxu0 %v294
    %1062 = vmatprep.subr.mxu0 0.0
    %1063 = vmatpush2.msra.mxu0 %v293
    %1064 = vmatprep.subr.mxu0 0.0
    %1065 = vmatpush2.msra.mxu0 %v292
    %1066 = vmatprep.subr.mxu0 0.0
    %1067 = vmatpush2.msra.mxu0 %v291
    %1068 = vmatprep.subr.mxu0 0.0
    %1069 = vmatpush2.msra.mxu0 %v290
    %1070 = vmatprep.mubr.f32.mxu0 %v36
    %1071 = vmatmul.mubr.f32.gmra.mxu0 %v35
    %v1072 = vpop.f32.mrf.mxu0
    %v1073 = vadd.f32 %v1003, %v1072
    %v1074 = vpop.f32.mrf.mxu0
    %1075 = vdwg.mxu0
    %1076 = vmatprep.subr.mxu0 0.0
    %1077 = vmatpush1.msra.mxu0 %v321
    %1078 = vmatprep.subr.mxu0 0.0
    %1079 = vmatpush1.msra.mxu0 %v320
    %1080 = vmatprep.subr.mxu0 0.0
    %1081 = vmatpush1.msra.mxu0 %v319
    %1082 = vmatprep.subr.mxu0 0.0
    %1083 = vmatpush1.msra.mxu0 %v318
    %1084 = vmatprep.subr.mxu0 0.0
    %1085 = vmatpush1.msra.mxu0 %v317
    %1086 = vmatprep.subr.mxu0 0.0
    %1087 = vmatpush1.msra.mxu0 %v316
    %1088 = vmatprep.subr.mxu0 0.0
    %1089 = vmatpush1.msra.mxu0 %v315
    %1090 = vmatprep.subr.mxu0 0.0
    %1091 = vmatpush1.msra.mxu0 %v314
    %1092 = vmatprep.subr.mxu0 0.0
    %1093 = vmatpush1.msra.mxu0 %v313
    %1094 = vmatprep.subr.mxu0 0.0
    %1095 = vmatpush1.msra.mxu0 %v312
    %1096 = vmatprep.subr.mxu0 0.0
    %1097 = vmatpush1.msra.mxu0 %v311
    %1098 = vmatprep.subr.mxu0 0.0
    %1099 = vmatpush1.msra.mxu0 %v310
    %1100 = vmatprep.subr.mxu0 0.0
    %1101 = vmatpush1.msra.mxu0 %v309
    %1102 = vmatprep.subr.mxu0 0.0
    %1103 = vmatpush1.msra.mxu0 %v308
    %1104 = vmatprep.subr.mxu0 0.0
    %1105 = vmatpush1.msra.mxu0 %v307
    %1106 = vmatprep.subr.mxu0 0.0
    %1107 = vmatpush1.msra.mxu0 %v306
    %1108 = vmatprep.subr.mxu0 0.0
    %1109 = vmatpush2.msra.mxu0 %v337
    %1110 = vmatprep.subr.mxu0 0.0
    %1111 = vmatpush2.msra.mxu0 %v336
    %1112 = vmatprep.subr.mxu0 0.0
    %1113 = vmatpush2.msra.mxu0 %v335
    %1114 = vmatprep.subr.mxu0 0.0
    %1115 = vmatpush2.msra.mxu0 %v334
    %1116 = vmatprep.subr.mxu0 0.0
    %1117 = vmatpush2.msra.mxu0 %v333
    %1118 = vmatprep.subr.mxu0 0.0
    %1119 = vmatpush2.msra.mxu0 %v332
    %1120 = vmatprep.subr.mxu0 0.0
    %1121 = vmatpush2.msra.mxu0 %v331
    %1122 = vmatprep.subr.mxu0 0.0
    %1123 = vmatpush2.msra.mxu0 %v330
    %1124 = vmatprep.subr.mxu0 0.0
    %1125 = vmatpush2.msra.mxu0 %v329
    %1126 = vmatprep.subr.mxu0 0.0
    %1127 = vmatpush2.msra.mxu0 %v328
    %1128 = vmatprep.subr.mxu0 0.0
    %1129 = vmatpush2.msra.mxu0 %v327
    %1130 = vmatprep.subr.mxu0 0.0
    %1131 = vmatpush2.msra.mxu0 %v326
    %1132 = vmatprep.subr.mxu0 0.0
    %1133 = vmatpush2.msra.mxu0 %v325
    %1134 = vmatprep.subr.mxu0 0.0
    %1135 = vmatpush2.msra.mxu0 %v324
    %1136 = vmatprep.subr.mxu0 0.0
    %1137 = vmatpush2.msra.mxu0 %v323
    %1138 = vmatprep.subr.mxu0 0.0
    %1139 = vmatpush2.msra.mxu0 %v322
    %1140 = vmatprep.mubr.f32.mxu0 %v38
    %1141 = vmatmul.mubr.f32.gmra.mxu0 %v37
    %v1142 = vpop.f32.mrf.mxu0
    %v1143 = vadd.f32 %v1073, %v1142
    %v1144 = vpop.f32.mrf.mxu0
    %1145 = vdwg.mxu0
    %1146 = vmatprep.subr.mxu0 0.0
    %1147 = vmatpush1.msra.mxu0 %v353
    %1148 = vmatprep.subr.mxu0 0.0
    %1149 = vmatpush1.msra.mxu0 %v352
    %1150 = vmatprep.subr.mxu0 0.0
    %1151 = vmatpush1.msra.mxu0 %v351
    %1152 = vmatprep.subr.mxu0 0.0
    %1153 = vmatpush1.msra.mxu0 %v350
    %1154 = vmatprep.subr.mxu0 0.0
    %1155 = vmatpush1.msra.mxu0 %v349
    %1156 = vmatprep.subr.mxu0 0.0
    %1157 = vmatpush1.msra.mxu0 %v348
    %1158 = vmatprep.subr.mxu0 0.0
    %1159 = vmatpush1.msra.mxu0 %v347
    %1160 = vmatprep.subr.mxu0 0.0
    %1161 = vmatpush1.msra.mxu0 %v346
    %1162 = vmatprep.subr.mxu0 0.0
    %1163 = vmatpush1.msra.mxu0 %v345
    %1164 = vmatprep.subr.mxu0 0.0
    %1165 = vmatpush1.msra.mxu0 %v344
    %1166 = vmatprep.subr.mxu0 0.0
    %1167 = vmatpush1.msra.mxu0 %v343
    %1168 = vmatprep.subr.mxu0 0.0
    %1169 = vmatpush1.msra.mxu0 %v342
    %1170 = vmatprep.subr.mxu0 0.0
    %1171 = vmatpush1.msra.mxu0 %v341
    %1172 = vmatprep.subr.mxu0 0.0
    %1173 = vmatpush1.msra.mxu0 %v340
    %1174 = vmatprep.subr.mxu0 0.0
    %1175 = vmatpush1.msra.mxu0 %v339
    %1176 = vmatprep.subr.mxu0 0.0
    %1177 = vmatpush1.msra.mxu0 %v338
    %1178 = vmatprep.subr.mxu0 0.0
    %1179 = vmatpush2.msra.mxu0 %v369
    %1180 = vmatprep.subr.mxu0 0.0
    %1181 = vmatpush2.msra.mxu0 %v368
    %1182 = vmatprep.subr.mxu0 0.0
    %1183 = vmatpush2.msra.mxu0 %v367
    %1184 = vmatprep.subr.mxu0 0.0
    %1185 = vmatpush2.msra.mxu0 %v366
    %1186 = vmatprep.subr.mxu0 0.0
    %1187 = vmatpush2.msra.mxu0 %v365
    %1188 = vmatprep.subr.mxu0 0.0
    %1189 = vmatpush2.msra.mxu0 %v364
    %1190 = vmatprep.subr.mxu0 0.0
    %1191 = vmatpush2.msra.mxu0 %v363
    %1192 = vmatprep.subr.mxu0 0.0
    %1193 = vmatpush2.msra.mxu0 %v362
    %1194 = vmatprep.subr.mxu0 0.0
    %1195 = vmatpush2.msra.mxu0 %v361
    %1196 = vmatprep.subr.mxu0 0.0
    %1197 = vmatpush2.msra.mxu0 %v360
    %1198 = vmatprep.subr.mxu0 0.0
    %1199 = vmatpush2.msra.mxu0 %v359
    %1200 = vmatprep.subr.mxu0 0.0
    %1201 = vmatpush2.msra.mxu0 %v358
    %1202 = vmatprep.subr.mxu0 0.0
    %1203 = vmatpush2.msra.mxu0 %v357
    %1204 = vmatprep.subr.mxu0 0.0
    %1205 = vmatpush2.msra.mxu0 %v356
    %1206 = vmatprep.subr.mxu0 0.0
    %1207 = vmatpush2.msra.mxu0 %v355
    %1208 = vmatprep.subr.mxu0 0.0
    %1209 = vmatpush2.msra.mxu0 %v354
    %1210 = vmatprep.mubr.f32.mxu0 %v40
    %1211 = vmatmul.mubr.f32.gmra.mxu0 %v39
    %v1212 = vpop.f32.mrf.mxu0
    %v1213 = vadd.f32 %v1143, %v1212
    %v1214 = vpop.f32.mrf.mxu0
    %1215 = vdwg.mxu0
    %1216 = vmatprep.subr.mxu0 0.0
    %1217 = vmatpush1.msra.mxu0 %v385
    %1218 = vmatprep.subr.mxu0 0.0
    %1219 = vmatpush1.msra.mxu0 %v384
    %1220 = vmatprep.subr.mxu0 0.0
    %1221 = vmatpush1.msra.mxu0 %v383
    %1222 = vmatprep.subr.mxu0 0.0
    %1223 = vmatpush1.msra.mxu0 %v382
    %1224 = vmatprep.subr.mxu0 0.0
    %1225 = vmatpush1.msra.mxu0 %v381
    %1226 = vmatprep.subr.mxu0 0.0
    %1227 = vmatpush1.msra.mxu0 %v380
    %1228 = vmatprep.subr.mxu0 0.0
    %1229 = vmatpush1.msra.mxu0 %v379
    %1230 = vmatprep.subr.mxu0 0.0
    %1231 = vmatpush1.msra.mxu0 %v378
    %1232 = vmatprep.subr.mxu0 0.0
    %1233 = vmatpush1.msra.mxu0 %v377
    %1234 = vmatprep.subr.mxu0 0.0
    %1235 = vmatpush1.msra.mxu0 %v376
    %1236 = vmatprep.subr.mxu0 0.0
    %1237 = vmatpush1.msra.mxu0 %v375
    %1238 = vmatprep.subr.mxu0 0.0
    %1239 = vmatpush1.msra.mxu0 %v374
    %1240 = vmatprep.subr.mxu0 0.0
    %1241 = vmatpush1.msra.mxu0 %v373
    %1242 = vmatprep.subr.mxu0 0.0
    %1243 = vmatpush1.msra.mxu0 %v372
    %1244 = vmatprep.subr.mxu0 0.0
    %1245 = vmatpush1.msra.mxu0 %v371
    %1246 = vmatprep.subr.mxu0 0.0
    %1247 = vmatpush1.msra.mxu0 %v370
    %1248 = vmatprep.subr.mxu0 0.0
    %1249 = vmatpush2.msra.mxu0 %v401
    %1250 = vmatprep.subr.mxu0 0.0
    %1251 = vmatpush2.msra.mxu0 %v400
    %1252 = vmatprep.subr.mxu0 0.0
    %1253 = vmatpush2.msra.mxu0 %v399
    %1254 = vmatprep.subr.mxu0 0.0
    %1255 = vmatpush2.msra.mxu0 %v398
    %1256 = vmatprep.subr.mxu0 0.0
    %1257 = vmatpush2.msra.mxu0 %v397
    %1258 = vmatprep.subr.mxu0 0.0
    %1259 = vmatpush2.msra.mxu0 %v396
    %1260 = vmatprep.subr.mxu0 0.0
    %1261 = vmatpush2.msra.mxu0 %v395
    %1262 = vmatprep.subr.mxu0 0.0
    %1263 = vmatpush2.msra.mxu0 %v394
    %1264 = vmatprep.subr.mxu0 0.0
    %1265 = vmatpush2.msra.mxu0 %v393
    %1266 = vmatprep.subr.mxu0 0.0
    %1267 = vmatpush2.msra.mxu0 %v392
    %1268 = vmatprep.subr.mxu0 0.0
    %1269 = vmatpush2.msra.mxu0 %v391
    %1270 = vmatprep.subr.mxu0 0.0
    %1271 = vmatpush2.msra.mxu0 %v390
    %1272 = vmatprep.subr.mxu0 0.0
    %1273 = vmatpush2.msra.mxu0 %v389
    %1274 = vmatprep.subr.mxu0 0.0
    %1275 = vmatpush2.msra.mxu0 %v388
    %1276 = vmatprep.subr.mxu0 0.0
    %1277 = vmatpush2.msra.mxu0 %v387
    %1278 = vmatprep.subr.mxu0 0.0
    %1279 = vmatpush2.msra.mxu0 %v386
    %1280 = vmatprep.mubr.f32.mxu0 %v42
    %1281 = vmatmul.mubr.f32.gmra.mxu0 %v41
    %v1282 = vpop.f32.mrf.mxu0
    %v1283 = vadd.f32 %v1213, %v1282
    %v1284 = vpop.f32.mrf.mxu0
    %1285 = vdwg.mxu0
    %1286 = vmatprep.subr.mxu0 0.0
    %1287 = vmatpush1.msra.mxu0 %v417
    %1288 = vmatprep.subr.mxu0 0.0
    %1289 = vmatpush1.msra.mxu0 %v416
    %1290 = vmatprep.subr.mxu0 0.0
    %1291 = vmatpush1.msra.mxu0 %v415
    %1292 = vmatprep.subr.mxu0 0.0
    %1293 = vmatpush1.msra.mxu0 %v414
    %1294 = vmatprep.subr.mxu0 0.0
    %1295 = vmatpush1.msra.mxu0 %v413
    %1296 = vmatprep.subr.mxu0 0.0
    %1297 = vmatpush1.msra.mxu0 %v412
    %1298 = vmatprep.subr.mxu0 0.0
    %1299 = vmatpush1.msra.mxu0 %v411
    %1300 = vmatprep.subr.mxu0 0.0
    %1301 = vmatpush1.msra.mxu0 %v410
    %1302 = vmatprep.subr.mxu0 0.0
    %1303 = vmatpush1.msra.mxu0 %v409
    %1304 = vmatprep.subr.mxu0 0.0
    %1305 = vmatpush1.msra.mxu0 %v408
    %1306 = vmatprep.subr.mxu0 0.0
    %1307 = vmatpush1.msra.mxu0 %v407
    %1308 = vmatprep.subr.mxu0 0.0
    %1309 = vmatpush1.msra.mxu0 %v406
    %1310 = vmatprep.subr.mxu0 0.0
    %1311 = vmatpush1.msra.mxu0 %v405
    %1312 = vmatprep.subr.mxu0 0.0
    %1313 = vmatpush1.msra.mxu0 %v404
    %1314 = vmatprep.subr.mxu0 0.0
    %1315 = vmatpush1.msra.mxu0 %v403
    %1316 = vmatprep.subr.mxu0 0.0
    %1317 = vmatpush1.msra.mxu0 %v402
    %1318 = vmatprep.subr.mxu0 0.0
    %1319 = vmatpush2.msra.mxu0 %v433
    %1320 = vmatprep.subr.mxu0 0.0
    %1321 = vmatpush2.msra.mxu0 %v432
    %1322 = vmatprep.subr.mxu0 0.0
    %1323 = vmatpush2.msra.mxu0 %v431
    %1324 = vmatprep.subr.mxu0 0.0
    %1325 = vmatpush2.msra.mxu0 %v430
    %1326 = vmatprep.subr.mxu0 0.0
    %1327 = vmatpush2.msra.mxu0 %v429
    %1328 = vmatprep.subr.mxu0 0.0
    %1329 = vmatpush2.msra.mxu0 %v428
    %1330 = vmatprep.subr.mxu0 0.0
    %1331 = vmatpush2.msra.mxu0 %v427
    %1332 = vmatprep.subr.mxu0 0.0
    %1333 = vmatpush2.msra.mxu0 %v426
    %1334 = vmatprep.subr.mxu0 0.0
    %1335 = vmatpush2.msra.mxu0 %v425
    %1336 = vmatprep.subr.mxu0 0.0
    %1337 = vmatpush2.msra.mxu0 %v424
    %1338 = vmatprep.subr.mxu0 0.0
    %1339 = vmatpush2.msra.mxu0 %v423
    %1340 = vmatprep.subr.mxu0 0.0
    %1341 = vmatpush2.msra.mxu0 %v422
    %1342 = vmatprep.subr.mxu0 0.0
    %1343 = vmatpush2.msra.mxu0 %v421
    %1344 = vmatprep.subr.mxu0 0.0
    %1345 = vmatpush2.msra.mxu0 %v420
    %1346 = vmatprep.subr.mxu0 0.0
    %1347 = vmatpush2.msra.mxu0 %v419
    %1348 = vmatprep.subr.mxu0 0.0
    %1349 = vmatpush2.msra.mxu0 %v418
    %1350 = vmatprep.mubr.f32.mxu0 %v44
    %1351 = vmatmul.mubr.f32.gmra.mxu0 %v43
    %v1352 = vpop.f32.mrf.mxu0
    %v1353 = vadd.f32 %v1283, %v1352
    %v1354 = vpop.f32.mrf.mxu0
    %1355 = vdwg.mxu0
    %1356 = vmatprep.subr.mxu0 0.0
    %1357 = vmatpush1.msra.mxu0 %v449
    %1358 = vmatprep.subr.mxu0 0.0
    %1359 = vmatpush1.msra.mxu0 %v448
    %1360 = vmatprep.subr.mxu0 0.0
    %1361 = vmatpush1.msra.mxu0 %v447
    %1362 = vmatprep.subr.mxu0 0.0
    %1363 = vmatpush1.msra.mxu0 %v446
    %1364 = vmatprep.subr.mxu0 0.0
    %1365 = vmatpush1.msra.mxu0 %v445
    %1366 = vmatprep.subr.mxu0 0.0
    %1367 = vmatpush1.msra.mxu0 %v444
    %1368 = vmatprep.subr.mxu0 0.0
    %1369 = vmatpush1.msra.mxu0 %v443
    %1370 = vmatprep.subr.mxu0 0.0
    %1371 = vmatpush1.msra.mxu0 %v442
    %1372 = vmatprep.subr.mxu0 0.0
    %1373 = vmatpush1.msra.mxu0 %v441
    %1374 = vmatprep.subr.mxu0 0.0
    %1375 = vmatpush1.msra.mxu0 %v440
    %1376 = vmatprep.subr.mxu0 0.0
    %1377 = vmatpush1.msra.mxu0 %v439
    %1378 = vmatprep.subr.mxu0 0.0
    %1379 = vmatpush1.msra.mxu0 %v438
    %1380 = vmatprep.subr.mxu0 0.0
    %1381 = vmatpush1.msra.mxu0 %v437
    %1382 = vmatprep.subr.mxu0 0.0
    %1383 = vmatpush1.msra.mxu0 %v436
    %1384 = vmatprep.subr.mxu0 0.0
    %1385 = vmatpush1.msra.mxu0 %v435
    %1386 = vmatprep.subr.mxu0 0.0
    %1387 = vmatpush1.msra.mxu0 %v434
    %1388 = vmatprep.subr.mxu0 0.0
    %1389 = vmatpush2.msra.mxu0 %v465
    %1390 = vmatprep.subr.mxu0 0.0
    %1391 = vmatpush2.msra.mxu0 %v464
    %1392 = vmatprep.subr.mxu0 0.0
    %1393 = vmatpush2.msra.mxu0 %v463
    %1394 = vmatprep.subr.mxu0 0.0
    %1395 = vmatpush2.msra.mxu0 %v462
    %1396 = vmatprep.subr.mxu0 0.0
    %1397 = vmatpush2.msra.mxu0 %v461
    %1398 = vmatprep.subr.mxu0 0.0
    %1399 = vmatpush2.msra.mxu0 %v460
    %1400 = vmatprep.subr.mxu0 0.0
    %1401 = vmatpush2.msra.mxu0 %v459
    %1402 = vmatprep.subr.mxu0 0.0
    %1403 = vmatpush2.msra.mxu0 %v458
    %1404 = vmatprep.subr.mxu0 0.0
    %1405 = vmatpush2.msra.mxu0 %v457
    %1406 = vmatprep.subr.mxu0 0.0
    %1407 = vmatpush2.msra.mxu0 %v456
    %1408 = vmatprep.subr.mxu0 0.0
    %1409 = vmatpush2.msra.mxu0 %v455
    %1410 = vmatprep.subr.mxu0 0.0
    %1411 = vmatpush2.msra.mxu0 %v454
    %1412 = vmatprep.subr.mxu0 0.0
    %1413 = vmatpush2.msra.mxu0 %v453
    %1414 = vmatprep.subr.mxu0 0.0
    %1415 = vmatpush2.msra.mxu0 %v452
    %1416 = vmatprep.subr.mxu0 0.0
    %1417 = vmatpush2.msra.mxu0 %v451
    %1418 = vmatprep.subr.mxu0 0.0
    %1419 = vmatpush2.msra.mxu0 %v450
    %1420 = vmatprep.mubr.f32.mxu0 %v46
    %1421 = vmatmul.mubr.f32.gmra.mxu0 %v45
    %v1422 = vpop.f32.mrf.mxu0
    %v1423 = vadd.f32 %v1353, %v1422
    %v1424 = vpop.f32.mrf.mxu0
    %1425 = vdwg.mxu0
    %1426 = vmatprep.subr.mxu0 0.0
    %1427 = vmatpush1.msra.mxu0 %v481
    %1428 = vmatprep.subr.mxu0 0.0
    %1429 = vmatpush1.msra.mxu0 %v480
    %1430 = vmatprep.subr.mxu0 0.0
    %1431 = vmatpush1.msra.mxu0 %v479
    %1432 = vmatprep.subr.mxu0 0.0
    %1433 = vmatpush1.msra.mxu0 %v478
    %1434 = vmatprep.subr.mxu0 0.0
    %1435 = vmatpush1.msra.mxu0 %v477
    %1436 = vmatprep.subr.mxu0 0.0
    %1437 = vmatpush1.msra.mxu0 %v476
    %1438 = vmatprep.subr.mxu0 0.0
    %1439 = vmatpush1.msra.mxu0 %v475
    %1440 = vmatprep.subr.mxu0 0.0
    %1441 = vmatpush1.msra.mxu0 %v474
    %1442 = vmatprep.subr.mxu0 0.0
    %1443 = vmatpush1.msra.mxu0 %v473
    %1444 = vmatprep.subr.mxu0 0.0
    %1445 = vmatpush1.msra.mxu0 %v472
    %1446 = vmatprep.subr.mxu0 0.0
    %1447 = vmatpush1.msra.mxu0 %v471
    %1448 = vmatprep.subr.mxu0 0.0
    %1449 = vmatpush1.msra.mxu0 %v470
    %1450 = vmatprep.subr.mxu0 0.0
    %1451 = vmatpush1.msra.mxu0 %v469
    %1452 = vmatprep.subr.mxu0 0.0
    %1453 = vmatpush1.msra.mxu0 %v468
    %1454 = vmatprep.subr.mxu0 0.0
    %1455 = vmatpush1.msra.mxu0 %v467
    %1456 = vmatprep.subr.mxu0 0.0
    %1457 = vmatpush1.msra.mxu0 %v466
    %1458 = vmatprep.subr.mxu0 0.0
    %1459 = vmatpush2.msra.mxu0 %v497
    %1460 = vmatprep.subr.mxu0 0.0
    %1461 = vmatpush2.msra.mxu0 %v496
    %1462 = vmatprep.subr.mxu0 0.0
    %1463 = vmatpush2.msra.mxu0 %v495
    %1464 = vmatprep.subr.mxu0 0.0
    %1465 = vmatpush2.msra.mxu0 %v494
    %1466 = vmatprep.subr.mxu0 0.0
    %1467 = vmatpush2.msra.mxu0 %v493
    %1468 = vmatprep.subr.mxu0 0.0
    %1469 = vmatpush2.msra.mxu0 %v492
    %1470 = vmatprep.subr.mxu0 0.0
    %1471 = vmatpush2.msra.mxu0 %v491
    %1472 = vmatprep.subr.mxu0 0.0
    %1473 = vmatpush2.msra.mxu0 %v490
    %1474 = vmatprep.subr.mxu0 0.0
    %1475 = vmatpush2.msra.mxu0 %v489
    %1476 = vmatprep.subr.mxu0 0.0
    %1477 = vmatpush2.msra.mxu0 %v488
    %1478 = vmatprep.subr.mxu0 0.0
    %1479 = vmatpush2.msra.mxu0 %v487
    %1480 = vmatprep.subr.mxu0 0.0
    %1481 = vmatpush2.msra.mxu0 %v486
    %1482 = vmatprep.subr.mxu0 0.0
    %1483 = vmatpush2.msra.mxu0 %v485
    %1484 = vmatprep.subr.mxu0 0.0
    %1485 = vmatpush2.msra.mxu0 %v484
    %1486 = vmatprep.subr.mxu0 0.0
    %1487 = vmatpush2.msra.mxu0 %v483
    %1488 = vmatprep.subr.mxu0 0.0
    %1489 = vmatpush2.msra.mxu0 %v482
    %1490 = vmatprep.mubr.f32.mxu0 %v48
    %1491 = vmatmul.mubr.f32.gmra.mxu0 %v47
    %v1492 = vpop.f32.mrf.mxu0
    %v1493 = vadd.f32 %v1423, %v1492
    %v1494 = vpop.f32.mrf.mxu0
    %1495 = vdwg.mxu0
    %1496 = vmatprep.subr.mxu0 0.0
    %1497 = vmatpush1.msra.mxu0 0.0
    %1498 = vmatprep.subr.mxu0 0.0
    %1499 = vmatpush1.msra.mxu0 0.0
    %1500 = vmatprep.subr.mxu0 0.0
    %1501 = vmatpush1.msra.mxu0 0.0
    %1502 = vmatprep.subr.mxu0 0.0
    %1503 = vmatpush1.msra.mxu0 0.0
    %1504 = vmatprep.subr.mxu0 0.0
    %1505 = vmatpush1.msra.mxu0 0.0
    %1506 = vmatprep.subr.mxu0 0.0
    %1507 = vmatpush1.msra.mxu0 0.0
    %1508 = vmatprep.subr.mxu0 0.0
    %1509 = vmatpush1.msra.mxu0 0.0
    %1510 = vmatprep.subr.mxu0 0.0
    %1511 = vmatpush1.msra.mxu0 0.0
    %1512 = vmatprep.subr.mxu0 0.0
    %1513 = vmatpush1.msra.mxu0 0.0
    %1514 = vmatprep.subr.mxu0 0.0
    %1515 = vmatpush1.msra.mxu0 0.0
    %1516 = vmatprep.subr.mxu0 0.0
    %1517 = vmatpush1.msra.mxu0 0.0
    %1518 = vmatprep.subr.mxu0 0.0
    %1519 = vmatpush1.msra.mxu0 0.0
    %1520 = vmatprep.subr.mxu0 0.0
    %1521 = vmatpush1.msra.mxu0 0.0
    %1522 = vmatprep.subr.mxu0 0.0
    %1523 = vmatpush1.msra.mxu0 %v514
    %1524 = vmatprep.subr.mxu0 0.0
    %1525 = vmatpush1.msra.mxu0 %v499
    %1526 = vmatprep.subr.mxu0 0.0
    %1527 = vmatpush1.msra.mxu0 %v498
    %1528 = vmatprep.subr.mxu0 0.0
    %1529 = vmatpush2.msra.mxu0 0.0
    %1530 = vmatprep.subr.mxu0 0.0
    %1531 = vmatpush2.msra.mxu0 0.0
    %1532 = vmatprep.subr.mxu0 0.0
    %1533 = vmatpush2.msra.mxu0 0.0
    %1534 = vmatprep.subr.mxu0 0.0
    %1535 = vmatpush2.msra.mxu0 0.0
    %1536 = vmatprep.subr.mxu0 0.0
    %1537 = vmatpush2.msra.mxu0 0.0
    %1538 = vmatprep.subr.mxu0 0.0
    %1539 = vmatpush2.msra.mxu0 0.0
    %1540 = vmatprep.subr.mxu0 0.0
    %1541 = vmatpush2.msra.mxu0 0.0
    %1542 = vmatprep.subr.mxu0 0.0
    %1543 = vmatpush2.msra.mxu0 0.0
    %1544 = vmatprep.subr.mxu0 0.0
    %1545 = vmatpush2.msra.mxu0 0.0
    %1546 = vmatprep.subr.mxu0 0.0
    %1547 = vmatpush2.msra.mxu0 0.0
    %1548 = vmatprep.subr.mxu0 0.0
    %1549 = vmatpush2.msra.mxu0 0.0
    %1550 = vmatprep.subr.mxu0 0.0
    %1551 = vmatpush2.msra.mxu0 0.0
    %1552 = vmatprep.subr.mxu0 0.0
    %1553 = vmatpush2.msra.mxu0 0.0
    %1554 = vmatprep.subr.mxu0 0.0
    %1555 = vmatpush2.msra.mxu0 0.0
    %1556 = vmatprep.subr.mxu0 0.0
    %1557 = vmatpush2.msra.mxu0 0.0
    %1558 = vmatprep.subr.mxu0 0.0
    %1559 = vmatpush2.msra.mxu0 0.0
    %1560 = vmatprep.mubr.f32.mxu0 0.0
    %1561 = vmatmul.mubr.f32.gmra.mxu0 %v510
    %v1562 = vpop.f32.mrf.mxu0
    %v1563 = vadd.f32 %v1493, %v1562
    %v1564 = vpop.f32.mrf.mxu0
    %1565 = vdwg.mxu0
    %v1566 = vtanh.pop %v1563
    %v1567 = vld [vmem:[%s3] sm:$0xff]
    %v1568 = vld [vmem:[%s3 + $0x8] sm:$0xff]
    %v1569 = vld [vmem:[%s3 + $0x10] sm:$0xff]
    %v1570 = vld [vmem:[%s3 + $0x18] sm:$0xff]
    %v1571 = vld [vmem:[%s3 + $0x20] sm:$0xff]
    %v1572 = vld [vmem:[%s3 + $0x28] sm:$0xff]
    %v1573 = vld [vmem:[%s3 + $0x30] sm:$0xff]
    %v1574 = vld [vmem:[%s3 + $0x38] sm:$0xff]
    %v1575 = vld [vmem:[%s3 + $0x40] sm:$0xff]
    %v1576 = vld [vmem:[%s3 + $0x48] sm:$0xff]
    %v1577 = vld [vmem:[%s3 + $0x50] sm:$0xff]
    %v1578 = vld [vmem:[%s3 + $0x58] sm:$0xff]
    %v1579 = vld [vmem:[%s3 + $0x60] sm:$0xff]
    %v1580 = vld [vmem:[%s3 + $0x68] sm:$0xff]
    %v1581 = vld [vmem:[%s3 + $0x70] sm:$0xff]
    %v1582 = vld [vmem:[%s3 + $0x78] sm:$0xff]
    %v1583 = vld [vmem:[%s3 + $0x80] sm:$0xff]
    %v1584 = vld [vmem:[%s3 + $0x88] sm:$0xff]
    %v1585 = vld [vmem:[%s3 + $0x90] sm:$0xff]
    %v1586 = vld [vmem:[%s3 + $0x98] sm:$0xff]
    %v1587 = vld [vmem:[%s3 + $0xa0] sm:$0xff]
    %v1588 = vld [vmem:[%s3 + $0xa8] sm:$0xff]
    %v1589 = vld [vmem:[%s3 + $0xb0] sm:$0xff]
    %v1590 = vld [vmem:[%s3 + $0xb8] sm:$0xff]
    %v1591 = vld [vmem:[%s3 + $0xc0] sm:$0xff]
    %v1592 = vld [vmem:[%s3 + $0xc8] sm:$0xff]
    %v1593 = vld [vmem:[%s3 + $0xd0] sm:$0xff]
    %v1594 = vld [vmem:[%s3 + $0xd8] sm:$0xff]
    %v1595 = vld [vmem:[%s3 + $0xe0] sm:$0xff]
    %v1596 = vld [vmem:[%s3 + $0xe8] sm:$0xff]
    %v1597 = vld [vmem:[%s3 + $0xf0] sm:$0xff]
    %v1598 = vld [vmem:[%s3 + $0xf8] sm:$0xff]
    %v1599 = vld [vmem:[%s3 + $0x100] sm:$0xff]
    %v1600 = vld [vmem:[%s3 + $0x108] sm:$0xff]
    %v1601 = vld [vmem:[%s3 + $0x110] sm:$0xff]
    %v1602 = vld [vmem:[%s3 + $0x118] sm:$0xff]
    %v1603 = vld [vmem:[%s3 + $0x120] sm:$0xff]
    %v1604 = vld [vmem:[%s3 + $0x128] sm:$0xff]
    %v1605 = vld [vmem:[%s3 + $0x130] sm:$0xff]
    %v1606 = vld [vmem:[%s3 + $0x138] sm:$0xff]
    %v1607 = vld [vmem:[%s3 + $0x140] sm:$0xff]
    %v1608 = vld [vmem:[%s3 + $0x148] sm:$0xff]
    %v1609 = vld [vmem:[%s3 + $0x150] sm:$0xff]
    %v1610 = vld [vmem:[%s3 + $0x158] sm:$0xff]
    %v1611 = vld [vmem:[%s3 + $0x160] sm:$0xff]
    %v1612 = vld [vmem:[%s3 + $0x168] sm:$0xff]
    %v1613 = vld [vmem:[%s3 + $0x170] sm:$0xff]
    %v1614 = vld [vmem:[%s3 + $0x178] sm:$0xff]
    %v1615 = vld [vmem:[%s3 + $0x180] sm:$0xff]
    %v1616 = vld [vmem:[%s3 + $0x188] sm:$0xff]
    %v1617 = vld [vmem:[%s3 + $0x190] sm:$0xff]
    %v1618 = vld [vmem:[%s3 + $0x198] sm:$0xff]
    %v1619 = vld [vmem:[%s3 + $0x1a0] sm:$0xff]
    %v1620 = vld [vmem:[%s3 + $0x1a8] sm:$0xff]
    %v1621 = vld [vmem:[%s3 + $0x1b0] sm:$0xff]
    %v1622 = vld [vmem:[%s3 + $0x1b8] sm:$0xff]
    %v1623 = vld [vmem:[%s3 + $0x1c0] sm:$0xff]
    %v1624 = vld [vmem:[%s3 + $0x1c8] sm:$0xff]
    %v1625 = vld [vmem:[%s3 + $0x1d0] sm:$0xff]
    %v1626 = vld [vmem:[%s3 + $0x1d8] sm:$0xff]
    %v1627 = vld [vmem:[%s3 + $0x1e0] sm:$0xff]
    %v1628 = vld [vmem:[%s3 + $0x1e8] sm:$0xff]
    %v1629 = vld [vmem:[%s3 + $0x1f0] sm:$0xff]
    %v1630 = vld [vmem:[%s3 + $0x1f8] sm:$0xff]
    %v1631 = vld [vmem:[%s3 + $0x200] sm:$0xff]
    %v1632 = vld [vmem:[%s3 + $0x208] sm:$0xff]
    %v1633 = vld [vmem:[%s3 + $0x210] sm:$0xff]
    %v1634 = vld [vmem:[%s3 + $0x218] sm:$0xff]
    %v1635 = vld [vmem:[%s3 + $0x220] sm:$0xff]
    %v1636 = vld [vmem:[%s3 + $0x228] sm:$0xff]
    %v1637 = vld [vmem:[%s3 + $0x230] sm:$0xff]
    %v1638 = vld [vmem:[%s3 + $0x238] sm:$0xff]
    %v1639 = vld [vmem:[%s3 + $0x240] sm:$0xff]
    %v1640 = vld [vmem:[%s3 + $0x248] sm:$0xff]
    %v1641 = vld [vmem:[%s3 + $0x250] sm:$0xff]
    %v1642 = vld [vmem:[%s3 + $0x258] sm:$0xff]
    %v1643 = vld [vmem:[%s3 + $0x260] sm:$0xff]
    %v1644 = vld [vmem:[%s3 + $0x268] sm:$0xff]
    %v1645 = vld [vmem:[%s3 + $0x270] sm:$0xff]
    %v1646 = vld [vmem:[%s3 + $0x278] sm:$0xff]
    %v1647 = vld [vmem:[%s3 + $0x280] sm:$0xff]
    %v1648 = vld [vmem:[%s3 + $0x288] sm:$0xff]
    %v1649 = vld [vmem:[%s3 + $0x290] sm:$0xff]
    %v1650 = vld [vmem:[%s3 + $0x298] sm:$0xff]
    %v1651 = vld [vmem:[%s3 + $0x2a0] sm:$0xff]
    %v1652 = vld [vmem:[%s3 + $0x2a8] sm:$0xff]
    %v1653 = vld [vmem:[%s3 + $0x2b0] sm:$0xff]
    %v1654 = vld [vmem:[%s3 + $0x2b8] sm:$0xff]
    %v1655 = vld [vmem:[%s3 + $0x2c0] sm:$0xff]
    %v1656 = vld [vmem:[%s3 + $0x2c8] sm:$0xff]
    %v1657 = vld [vmem:[%s3 + $0x2d0] sm:$0xff]
    %v1658 = vld [vmem:[%s3 + $0x2d8] sm:$0xff]
    %v1659 = vld [vmem:[%s3 + $0x2e0] sm:$0xff]
    %v1660 = vld [vmem:[%s3 + $0x2e8] sm:$0xff]
    %v1661 = vld [vmem:[%s3 + $0x2f0] sm:$0xff]
    %v1662 = vld [vmem:[%s3 + $0x2f8] sm:$0xff]
    %v1663 = vld [vmem:[%s3 + $0x300] sm:$0xff]
    %v1664 = vld [vmem:[%s3 + $0x308] sm:$0xff]
    %v1665 = vld [vmem:[%s3 + $0x310] sm:$0xff]
    %v1666 = vld [vmem:[%s3 + $0x318] sm:$0xff]
    %v1667 = vld [vmem:[%s3 + $0x320] sm:$0xff]
    %v1668 = vld [vmem:[%s3 + $0x328] sm:$0xff]
    %v1669 = vld [vmem:[%s3 + $0x330] sm:$0xff]
    %v1670 = vld [vmem:[%s3 + $0x338] sm:$0xff]
    %v1671 = vld [vmem:[%s3 + $0x340] sm:$0xff]
    %v1672 = vld [vmem:[%s3 + $0x348] sm:$0xff]
    %v1673 = vld [vmem:[%s3 + $0x350] sm:$0xff]
    %v1674 = vld [vmem:[%s3 + $0x358] sm:$0xff]
    %v1675 = vld [vmem:[%s3 + $0x360] sm:$0xff]
    %v1676 = vld [vmem:[%s3 + $0x368] sm:$0xff]
    %v1677 = vld [vmem:[%s3 + $0x370] sm:$0xff]
    %v1678 = vld [vmem:[%s3 + $0x378] sm:$0xff]
    %v1679 = vld [vmem:[%s3 + $0x380] sm:$0xff]
    %v1680 = vld [vmem:[%s3 + $0x388] sm:$0xff]
    %v1681 = vld [vmem:[%s3 + $0x390] sm:$0xff]
    %v1682 = vld [vmem:[%s3 + $0x398] sm:$0xff]
    %v1683 = vld [vmem:[%s4] sm:$0xff]
    %v1684 = vld [vmem:[%s4 + $0x8] sm:$0xff]
    %v1685 = vld [vmem:[%s4 + $0x10] sm:$0xff]
    %v1686 = vld [vmem:[%s4 + $0x18] sm:$0x1f]
    %v1691 = vlaneseq
    %v1692 = vshrl.u32 %v1691, 7
    %v1693 = vsub.s32 0, %v1692
    %v1694 = vrot.slane %v1683, %v1693
    %v1695 = vlaneseq
    %v1696 = vshrl.u32 %v1695, 7
    %v1697 = vsub.s32 1, %v1696
    %v1698 = vrot.slane %v1683, %v1697
    %v1699 = vlaneseq
    %v1700 = vshrl.u32 %v1699, 7
    %v1701 = vsub.s32 2, %v1700
    %v1702 = vrot.slane %v1683, %v1701
    %v1703 = vlaneseq
    %v1704 = vshrl.u32 %v1703, 7
    %v1705 = vsub.s32 3, %v1704
    %v1706 = vrot.slane %v1683, %v1705
    %v1707 = vlaneseq
    %v1708 = vshrl.u32 %v1707, 7
    %v1709 = vsub.s32 4, %v1708
    %v1710 = vrot.slane %v1683, %v1709
    %v1711 = vlaneseq
    %v1712 = vshrl.u32 %v1711, 7
    %v1713 = vsub.s32 5, %v1712
    %v1714 = vrot.slane %v1683, %v1713
    %v1715 = vlaneseq
    %v1716 = vshrl.u32 %v1715, 7
    %v1717 = vsub.s32 6, %v1716
    %v1718 = vrot.slane %v1683, %v1717
    %v1719 = vlaneseq
    %v1720 = vshrl.u32 %v1719, 7
    %v1721 = vsub.s32 7, %v1720
    %v1722 = vrot.slane %v1683, %v1721
    %v1723 = vlaneseq
    %v1724 = vshrl.u32 %v1723, 7
    %v1725 = vsub.s32 0, %v1724
    %v1726 = vrot.slane %v1684, %v1725
    %v1727 = vlaneseq
    %v1728 = vshrl.u32 %v1727, 7
    %v1729 = vsub.s32 1, %v1728
    %v1730 = vrot.slane %v1684, %v1729
    %v1731 = vlaneseq
    %v1732 = vshrl.u32 %v1731, 7
    %v1733 = vsub.s32 2, %v1732
    %v1734 = vrot.slane %v1684, %v1733
    %v1735 = vlaneseq
    %v1736 = vshrl.u32 %v1735, 7
    %v1737 = vsub.s32 3, %v1736
    %v1738 = vrot.slane %v1684, %v1737
    %v1739 = vlaneseq
    %v1740 = vshrl.u32 %v1739, 7
    %v1741 = vsub.s32 4, %v1740
    %v1742 = vrot.slane %v1684, %v1741
    %v1743 = vlaneseq
    %v1744 = vshrl.u32 %v1743, 7
    %v1745 = vsub.s32 5, %v1744
    %v1746 = vrot.slane %v1684, %v1745
    %v1747 = vlaneseq
    %v1748 = vshrl.u32 %v1747, 7
    %v1749 = vsub.s32 6, %v1748
    %v1750 = vrot.slane %v1684, %v1749
    %v1751 = vlaneseq
    %v1752 = vshrl.u32 %v1751, 7
    %v1753 = vsub.s32 7, %v1752
    %v1754 = vrot.slane %v1684, %v1753
    %v1755 = vlaneseq
    %v1756 = vshrl.u32 %v1755, 7
    %v1757 = vsub.s32 0, %v1756
    %v1758 = vrot.slane %v1685, %v1757
    %v1759 = vlaneseq
    %v1760 = vshrl.u32 %v1759, 7
    %v1761 = vsub.s32 1, %v1760
    %v1762 = vrot.slane %v1685, %v1761
    %v1763 = vlaneseq
    %v1764 = vshrl.u32 %v1763, 7
    %v1765 = vsub.s32 2, %v1764
    %v1766 = vrot.slane %v1685, %v1765
    %v1767 = vlaneseq
    %v1768 = vshrl.u32 %v1767, 7
    %v1769 = vsub.s32 3, %v1768
    %v1770 = vrot.slane %v1685, %v1769
    %v1771 = vlaneseq
    %v1772 = vshrl.u32 %v1771, 7
    %v1773 = vsub.s32 4, %v1772
    %v1774 = vrot.slane %v1685, %v1773
    %v1775 = vlaneseq
    %v1776 = vshrl.u32 %v1775, 7
    %v1777 = vsub.s32 5, %v1776
    %v1778 = vrot.slane %v1685, %v1777
    %v1779 = vlaneseq
    %v1780 = vshrl.u32 %v1779, 7
    %v1781 = vsub.s32 6, %v1780
    %v1782 = vrot.slane %v1685, %v1781
    %v1783 = vlaneseq
    %v1784 = vshrl.u32 %v1783, 7
    %v1785 = vsub.s32 7, %v1784
    %v1786 = vrot.slane %v1685, %v1785
    %v1787 = vlaneseq
    %v1788 = vshrl.u32 %v1787, 7
    %v1789 = vsub.s32 0, %v1788
    %v1790 = vrot.slane %v1686, %v1789
    %v1791 = vlaneseq
    %v1792 = vshrl.u32 %v1791, 7
    %v1793 = vsub.s32 1, %v1792
    %v1794 = vrot.slane %v1686, %v1793
    %v1795 = vlaneseq
    %v1796 = vshrl.u32 %v1795, 7
    %v1797 = vsub.s32 2, %v1796
    %v1798 = vrot.slane %v1686, %v1797
    %v1799 = vlaneseq
    %v1800 = vshrl.u32 %v1799, 7
    %v1801 = vsub.s32 3, %v1800
    %v1802 = vrot.slane %v1686, %v1801
    %v1803 = vlaneseq
    %v1804 = vshrl.u32 %v1803, 7
    %v1805 = vsub.s32 4, %v1804
    %v1806 = vrot.slane %v1686, %v1805
    %vm1836 = vcmask 261120
    %v1838 = vsel %vm1836, %v1566, 0
    %1840 = vmatprep.subr.mxu0 0.0
    %1841 = vmatpush1.msra.mxu0 0.0
    %1842 = vmatprep.subr.mxu0 0.0
    %1843 = vmatpush1.msra.mxu0 0.0
    %1844 = vmatprep.subr.mxu0 0.0
    %1845 = vmatpush1.msra.mxu0 0.0
    %1846 = vmatprep.subr.mxu0 0.0
    %1847 = vmatpush1.msra.mxu0 0.0
    %1848 = vmatprep.subr.mxu0 0.0
    %1849 = vmatpush1.msra.mxu0 0.0
    %1850 = vmatprep.subr.mxu0 0.0
    %1851 = vmatpush1.msra.mxu0 0.0
    %1852 = vmatprep.subr.mxu0 0.0
    %1853 = vmatpush1.msra.mxu0 0.0
    %1854 = vmatprep.subr.mxu0 0.0
    %1855 = vmatpush1.msra.mxu0 0.0
    %1856 = vmatprep.subr.mxu0 0.0
    %1857 = vmatpush1.msra.mxu0 0.0
    %1858 = vmatprep.subr.mxu0 0.0
    %1859 = vmatpush1.msra.mxu0 0.0
    %1860 = vmatprep.subr.mxu0 0.0
    %1861 = vmatpush1.msra.mxu0 0.0
    %1862 = vmatprep.subr.mxu0 0.0
    %1863 = vmatpush1.msra.mxu0 0.0
    %1864 = vmatprep.subr.mxu0 %v1655
    %1865 = vmatpush1.msra.mxu0 %v1654
    %1866 = vmatprep.subr.mxu0 %v1626
    %1867 = vmatpush1.msra.mxu0 %v1625
    %1868 = vmatprep.subr.mxu0 %v1597
    %1869 = vmatpush1.msra.mxu0 %v1596
    %1870 = vmatprep.subr.mxu0 %v1568
    %1871 = vmatpush1.msra.mxu0 %v1567
    %1872 = vmatprep.subr.mxu0 0.0
    %1873 = vmatpush2.msra.mxu0 0.0
    %1874 = vmatprep.subr.mxu0 0.0
    %1875 = vmatpush2.msra.mxu0 0.0
    %1876 = vmatprep.subr.mxu0 0.0
    %1877 = vmatpush2.msra.mxu0 0.0
    %1878 = vmatprep.subr.mxu0 0.0
    %1879 = vmatpush2.msra.mxu0 0.0
    %1880 = vmatprep.subr.mxu0 0.0
    %1881 = vmatpush2.msra.mxu0 0.0
    %1882 = vmatprep.subr.mxu0 0.0
    %1883 = vmatpush2.msra.mxu0 0.0
    %1884 = vmatprep.subr.mxu0 0.0
    %1885 = vmatpush2.msra.mxu0 0.0
    %1886 = vmatprep.subr.mxu0 0.0
    %1887 = vmatpush2.msra.mxu0 0.0
    %1888 = vmatprep.subr.mxu0 0.0
    %1889 = vmatpush2.msra.mxu0 0.0
    %1890 = vmatprep.subr.mxu0 0.0
    %1891 = vmatpush2.msra.mxu0 0.0
    %1892 = vmatprep.subr.mxu0 0.0
    %1893 = vmatpush2.msra.mxu0 0.0
    %1894 = vmatprep.subr.mxu0 0.0
    %1895 = vmatpush2.msra.mxu0 0.0
    %1896 = vmatprep.subr.mxu0 0.0
    %1897 = vmatpush2.msra.mxu0 0.0
    %1898 = vmatprep.subr.mxu0 0.0
    %1899 = vmatpush2.msra.mxu0 0.0
    %1900 = vmatprep.subr.mxu0 0.0
    %1901 = vmatpush2.msra.mxu0 0.0
    %1902 = vmatprep.subr.mxu0 0.0
    %1903 = vmatpush2.msra.mxu0 0.0
    %1904 = vmatprep.mubr.f32.mxu0 0.0
    %1905 = vmatmul.mubr.f32.gmra.mxu0 %v1838
    %v1906 = vpop.f32.mrf.mxu0
    %v1907 = vadd.f32 %v1694, %v1906
    %v1908 = vpop.f32.mrf.mxu0
    %v1909 = vadd.f32 %v1698, %v1908
    %1910 = vdwg.mxu0
    %1911 = vmatprep.subr.mxu0 0.0
    %1912 = vmatpush1.msra.mxu0 0.0
    %1913 = vmatprep.subr.mxu0 0.0
    %1914 = vmatpush1.msra.mxu0 0.0
    %1915 = vmatprep.subr.mxu0 0.0
    %1916 = vmatpush1.msra.mxu0 0.0
    %1917 = vmatprep.subr.mxu0 0.0
    %1918 = vmatpush1.msra.mxu0 0.0
    %1919 = vmatprep.subr.mxu0 0.0
    %1920 = vmatpush1.msra.mxu0 0.0
    %1921 = vmatprep.subr.mxu0 0.0
    %1922 = vmatpush1.msra.mxu0 0.0
    %1923 = vmatprep.subr.mxu0 0.0
    %1924 = vmatpush1.msra.mxu0 0.0
    %1925 = vmatprep.subr.mxu0 0.0
    %1926 = vmatpush1.msra.mxu0 0.0
    %1927 = vmatprep.subr.mxu0 0.0
    %1928 = vmatpush1.msra.mxu0 0.0
    %1929 = vmatprep.subr.mxu0 0.0
    %1930 = vmatpush1.msra.mxu0 0.0
    %1931 = vmatprep.subr.mxu0 0.0
    %1932 = vmatpush1.msra.mxu0 0.0
    %1933 = vmatprep.subr.mxu0 0.0
    %1934 = vmatpush1.msra.mxu0 0.0
    %1935 = vmatprep.subr.mxu0 %v1657
    %1936 = vmatpush1.msra.mxu0 %v1656
    %1937 = vmatprep.subr.mxu0 %v1628
    %1938 = vmatpush1.msra.mxu0 %v1627
    %1939 = vmatprep.subr.mxu0 %v1599
    %1940 = vmatpush1.msra.mxu0 %v1598
    %1941 = vmatprep.subr.mxu0 %v1570
    %1942 = vmatpush1.msra.mxu0 %v1569
    %1943 = vmatprep.subr.mxu0 0.0
    %1944 = vmatpush2.msra.mxu0 0.0
    %1945 = vmatprep.subr.mxu0 0.0
    %1946 = vmatpush2.msra.mxu0 0.0
    %1947 = vmatprep.subr.mxu0 0.0
    %1948 = vmatpush2.msra.mxu0 0.0
    %1949 = vmatprep.subr.mxu0 0.0
    %1950 = vmatpush2.msra.mxu0 0.0
    %1951 = vmatprep.subr.mxu0 0.0
    %1952 = vmatpush2.msra.mxu0 0.0
    %1953 = vmatprep.subr.mxu0 0.0
    %1954 = vmatpush2.msra.mxu0 0.0
    %1955 = vmatprep.subr.mxu0 0.0
    %1956 = vmatpush2.msra.mxu0 0.0
    %1957 = vmatprep.subr.mxu0 0.0
    %1958 = vmatpush2.msra.mxu0 0.0
    %1959 = vmatprep.subr.mxu0 0.0
    %1960 = vmatpush2.msra.mxu0 0.0
    %1961 = vmatprep.subr.mxu0 0.0
    %1962 = vmatpush2.msra.mxu0 0.0
    %1963 = vmatprep.subr.mxu0 0.0
    %1964 = vmatpush2.msra.mxu0 0.0
    %1965 = vmatprep.subr.mxu0 0.0
    %1966 = vmatpush2.msra.mxu0 0.0
    %1967 = vmatprep.subr.mxu0 0.0
    %1968 = vmatpush2.msra.mxu0 0.0
    %1969 = vmatprep.subr.mxu0 0.0
    %1970 = vmatpush2.msra.mxu0 0.0
    %1971 = vmatprep.subr.mxu0 0.0
    %1972 = vmatpush2.msra.mxu0 0.0
    %1973 = vmatprep.subr.mxu0 0.0
    %1974 = vmatpush2.msra.mxu0 0.0
    %1975 = vmatprep.mubr.f32.mxu0 0.0
    %1976 = vmatmul.mubr.f32.gmra.mxu0 %v1838
    %v1977 = vpop.f32.mrf.mxu0
    %v1978 = vadd.f32 %v1702, %v1977
    %v1979 = vpop.f32.mrf.mxu0
    %v1980 = vadd.f32 %v1706, %v1979
    %1981 = vdwg.mxu0
    %1982 = vmatprep.subr.mxu0 0.0
    %1983 = vmatpush1.msra.mxu0 0.0
    %1984 = vmatprep.subr.mxu0 0.0
    %1985 = vmatpush1.msra.mxu0 0.0
    %1986 = vmatprep.subr.mxu0 0.0
    %1987 = vmatpush1.msra.mxu0 0.0
    %1988 = vmatprep.subr.mxu0 0.0
    %1989 = vmatpush1.msra.mxu0 0.0
    %1990 = vmatprep.subr.mxu0 0.0
    %1991 = vmatpush1.msra.mxu0 0.0
    %1992 = vmatprep.subr.mxu0 0.0
    %1993 = vmatpush1.msra.mxu0 0.0
    %1994 = vmatprep.subr.mxu0 0.0
    %1995 = vmatpush1.msra.mxu0 0.0
    %1996 = vmatprep.subr.mxu0 0.0
    %1997 = vmatpush1.msra.mxu0 0.0
    %1998 = vmatprep.subr.mxu0 0.0
    %1999 = vmatpush1.msra.mxu0 0.0
    %2000 = vmatprep.subr.mxu0 0.0
    %2001 = vmatpush1.msra.mxu0 0.0
    %2002 = vmatprep.subr.mxu0 0.0
    %2003 = vmatpush1.msra.mxu0 0.0
    %2004 = vmatprep.subr.mxu0 0.0
    %2005 = vmatpush1.msra.mxu0 0.0
    %2006 = vmatprep.subr.mxu0 %v1659
    %2007 = vmatpush1.msra.mxu0 %v1658
    %2008 = vmatprep.subr.mxu0 %v1630
    %2009 = vmatpush1.msra.mxu0 %v1629
    %2010 = vmatprep.subr.mxu0 %v1601
    %2011 = vmatpush1.msra.mxu0 %v1600
    %2012 = vmatprep.subr.mxu0 %v1572
    %2013 = vmatpush1.msra.mxu0 %v1571
    %2014 = vmatprep.subr.mxu0 0.0
    %2015 = vmatpush2.msra.mxu0 0.0
    %2016 = vmatprep.subr.mxu0 0.0
    %2017 = vmatpush2.msra.mxu0 0.0
    %2018 = vmatprep.subr.mxu0 0.0
    %2019 = vmatpush2.msra.mxu0 0.0
    %2020 = vmatprep.subr.mxu0 0.0
    %2021 = vmatpush2.msra.mxu0 0.0
    %2022 = vmatprep.subr.mxu0 0.0
    %2023 = vmatpush2.msra.mxu0 0.0
    %2024 = vmatprep.subr.mxu0 0.0
    %2025 = vmatpush2.msra.mxu0 0.0
    %2026 = vmatprep.subr.mxu0 0.0
    %2027 = vmatpush2.msra.mxu0 0.0
    %2028 = vmatprep.subr.mxu0 0.0
    %2029 = vmatpush2.msra.mxu0 0.0
    %2030 = vmatprep.subr.mxu0 0.0
    %2031 = vmatpush2.msra.mxu0 0.0
    %2032 = vmatprep.subr.mxu0 0.0
    %2033 = vmatpush2.msra.mxu0 0.0
    %2034 = vmatprep.subr.mxu0 0.0
    %2035 = vmatpush2.msra.mxu0 0.0
    %2036 = vmatprep.subr.mxu0 0.0
    %2037 = vmatpush2.msra.mxu0 0.0
    %2038 = vmatprep.subr.mxu0 0.0
    %2039 = vmatpush2.msra.mxu0 0.0
    %2040 = vmatprep.subr.mxu0 0.0
    %2041 = vmatpush2.msra.mxu0 0.0
    %2042 = vmatprep.subr.mxu0 0.0
    %2043 = vmatpush2.msra.mxu0 0.0
    %2044 = vmatprep.subr.mxu0 0.0
    %2045 = vmatpush2.msra.mxu0 0.0
    %2046 = vmatprep.mubr.f32.mxu0 0.0
    %2047 = vmatmul.mubr.f32.gmra.mxu0 %v1838
    %v2048 = vpop.f32.mrf.mxu0
    %v2049 = vadd.f32 %v1710, %v2048
    %v2050 = vpop.f32.mrf.mxu0
    %v2051 = vadd.f32 %v1714, %v2050
    %2052 = vdwg.mxu0
    %2053 = vmatprep.subr.mxu0 0.0
    %2054 = vmatpush1.msra.mxu0 0.0
    %2055 = vmatprep.subr.mxu0 0.0
    %2056 = vmatpush1.msra.mxu0 0.0
    %2057 = vmatprep.subr.mxu0 0.0
    %2058 = vmatpush1.msra.mxu0 0.0
    %2059 = vmatprep.subr.mxu0 0.0
    %2060 = vmatpush1.msra.mxu0 0.0
    %2061 = vmatprep.subr.mxu0 0.0
    %2062 = vmatpush1.msra.mxu0 0.0
    %2063 = vmatprep.subr.mxu0 0.0
    %2064 = vmatpush1.msra.mxu0 0.0
    %2065 = vmatprep.subr.mxu0 0.0
    %2066 = vmatpush1.msra.mxu0 0.0
    %2067 = vmatprep.subr.mxu0 0.0
    %2068 = vmatpush1.msra.mxu0 0.0
    %2069 = vmatprep.subr.mxu0 0.0
    %2070 = vmatpush1.msra.mxu0 0.0
    %2071 = vmatprep.subr.mxu0 0.0
    %2072 = vmatpush1.msra.mxu0 0.0
    %2073 = vmatprep.subr.mxu0 0.0
    %2074 = vmatpush1.msra.mxu0 0.0
    %2075 = vmatprep.subr.mxu0 0.0
    %2076 = vmatpush1.msra.mxu0 0.0
    %2077 = vmatprep.subr.mxu0 %v1661
    %2078 = vmatpush1.msra.mxu0 %v1660
    %2079 = vmatprep.subr.mxu0 %v1632
    %2080 = vmatpush1.msra.mxu0 %v1631
    %2081 = vmatprep.subr.mxu0 %v1603
    %2082 = vmatpush1.msra.mxu0 %v1602
    %2083 = vmatprep.subr.mxu0 %v1574
    %2084 = vmatpush1.msra.mxu0 %v1573
    %2085 = vmatprep.subr.mxu0 0.0
    %2086 = vmatpush2.msra.mxu0 0.0
    %2087 = vmatprep.subr.mxu0 0.0
    %2088 = vmatpush2.msra.mxu0 0.0
    %2089 = vmatprep.subr.mxu0 0.0
    %2090 = vmatpush2.msra.mxu0 0.0
    %2091 = vmatprep.subr.mxu0 0.0
    %2092 = vmatpush2.msra.mxu0 0.0
    %2093 = vmatprep.subr.mxu0 0.0
    %2094 = vmatpush2.msra.mxu0 0.0
    %2095 = vmatprep.subr.mxu0 0.0
    %2096 = vmatpush2.msra.mxu0 0.0
    %2097 = vmatprep.subr.mxu0 0.0
    %2098 = vmatpush2.msra.mxu0 0.0
    %2099 = vmatprep.subr.mxu0 0.0
    %2100 = vmatpush2.msra.mxu0 0.0
    %2101 = vmatprep.subr.mxu0 0.0
    %2102 = vmatpush2.msra.mxu0 0.0
    %2103 = vmatprep.subr.mxu0 0.0
    %2104 = vmatpush2.msra.mxu0 0.0
    %2105 = vmatprep.subr.mxu0 0.0
    %2106 = vmatpush2.msra.mxu0 0.0
    %2107 = vmatprep.subr.mxu0 0.0
    %2108 = vmatpush2.msra.mxu0 0.0
    %2109 = vmatprep.subr.mxu0 0.0
    %2110 = vmatpush2.msra.mxu0 0.0
    %2111 = vmatprep.subr.mxu0 0.0
    %2112 = vmatpush2.msra.mxu0 0.0
    %2113 = vmatprep.subr.mxu0 0.0
    %2114 = vmatpush2.msra.mxu0 0.0
    %2115 = vmatprep.subr.mxu0 0.0
    %2116 = vmatpush2.msra.mxu0 0.0
    %2117 = vmatprep.mubr.f32.mxu0 0.0
    %2118 = vmatmul.mubr.f32.gmra.mxu0 %v1838
    %v2119 = vpop.f32.mrf.mxu0
    %v2120 = vadd.f32 %v1718, %v2119
    %v2121 = vpop.f32.mrf.mxu0
    %v2122 = vadd.f32 %v1722, %v2121
    %2123 = vdwg.mxu0
    %2124 = vmatprep.subr.mxu0 0.0
    %2125 = vmatpush1.msra.mxu0 0.0
    %2126 = vmatprep.subr.mxu0 0.0
    %2127 = vmatpush1.msra.mxu0 0.0
    %2128 = vmatprep.subr.mxu0 0.0
    %2129 = vmatpush1.msra.mxu0 0.0
    %2130 = vmatprep.subr.mxu0 0.0
    %2131 = vmatpush1.msra.mxu0 0.0
    %2132 = vmatprep.subr.mxu0 0.0
    %2133 = vmatpush1.msra.mxu0 0.0
    %2134 = vmatprep.subr.mxu0 0.0
    %2135 = vmatpush1.msra.mxu0 0.0
    %2136 = vmatprep.subr.mxu0 0.0
    %2137 = vmatpush1.msra.mxu0 0.0
    %2138 = vmatprep.subr.mxu0 0.0
    %2139 = vmatpush1.msra.mxu0 0.0
    %2140 = vmatprep.subr.mxu0 0.0
    %2141 = vmatpush1.msra.mxu0 0.0
    %2142 = vmatprep.subr.mxu0 0.0
    %2143 = vmatpush1.msra.mxu0 0.0
    %2144 = vmatprep.subr.mxu0 0.0
    %2145 = vmatpush1.msra.mxu0 0.0
    %2146 = vmatprep.subr.mxu0 0.0
    %2147 = vmatpush1.msra.mxu0 0.0
    %2148 = vmatprep.subr.mxu0 %v1663
    %2149 = vmatpush1.msra.mxu0 %v1662
    %2150 = vmatprep.subr.mxu0 %v1634
    %2151 = vmatpush1.msra.mxu0 %v1633
    %2152 = vmatprep.subr.mxu0 %v1605
    %2153 = vmatpush1.msra.mxu0 %v1604
    %2154 = vmatprep.subr.mxu0 %v1576
    %2155 = vmatpush1.msra.mxu0 %v1575
    %2156 = vmatprep.subr.mxu0 0.0
    %2157 = vmatpush2.msra.mxu0 0.0
    %2158 = vmatprep.subr.mxu0 0.0
    %2159 = vmatpush2.msra.mxu0 0.0
    %2160 = vmatprep.subr.mxu0 0.0
    %2161 = vmatpush2.msra.mxu0 0.0
    %2162 = vmatprep.subr.mxu0 0.0
    %2163 = vmatpush2.msra.mxu0 0.0
    %2164 = vmatprep.subr.mxu0 0.0
    %2165 = vmatpush2.msra.mxu0 0.0
    %2166 = vmatprep.subr.mxu0 0.0
    %2167 = vmatpush2.msra.mxu0 0.0
    %2168 = vmatprep.subr.mxu0 0.0
    %2169 = vmatpush2.msra.mxu0 0.0
    %2170 = vmatprep.subr.mxu0 0.0
    %2171 = vmatpush2.msra.mxu0 0.0
    %2172 = vmatprep.subr.mxu0 0.0
    %2173 = vmatpush2.msra.mxu0 0.0
    %2174 = vmatprep.subr.mxu0 0.0
    %2175 = vmatpush2.msra.mxu0 0.0
    %2176 = vmatprep.subr.mxu0 0.0
    %2177 = vmatpush2.msra.mxu0 0.0
    %2178 = vmatprep.subr.mxu0 0.0
    %2179 = vmatpush2.msra.mxu0 0.0
    %2180 = vmatprep.subr.mxu0 0.0
    %2181 = vmatpush2.msra.mxu0 0.0
    %2182 = vmatprep.subr.mxu0 0.0
    %2183 = vmatpush2.msra.mxu0 0.0
    %2184 = vmatprep.subr.mxu0 0.0
    %2185 = vmatpush2.msra.mxu0 0.0
    %2186 = vmatprep.subr.mxu0 0.0
    %2187 = vmatpush2.msra.mxu0 0.0
    %2188 = vmatprep.mubr.f32.mxu0 0.0
    %2189 = vmatmul.mubr.f32.gmra.mxu0 %v1838
    %v2190 = vpop.f32.mrf.mxu0
    %v2191 = vadd.f32 %v1726, %v2190
    %v2192 = vpop.f32.mrf.mxu0
    %v2193 = vadd.f32 %v1730, %v2192
    %2194 = vdwg.mxu0
    %2195 = vmatprep.subr.mxu0 0.0
    %2196 = vmatpush1.msra.mxu0 0.0
    %2197 = vmatprep.subr.mxu0 0.0
    %2198 = vmatpush1.msra.mxu0 0.0
    %2199 = vmatprep.subr.mxu0 0.0
    %2200 = vmatpush1.msra.mxu0 0.0
    %2201 = vmatprep.subr.mxu0 0.0
    %2202 = vmatpush1.msra.mxu0 0.0
    %2203 = vmatprep.subr.mxu0 0.0
    %2204 = vmatpush1.msra.mxu0 0.0
    %2205 = vmatprep.subr.mxu0 0.0
    %2206 = vmatpush1.msra.mxu0 0.0
    %2207 = vmatprep.subr.mxu0 0.0
    %2208 = vmatpush1.msra.mxu0 0.0
    %2209 = vmatprep.subr.mxu0 0.0
    %2210 = vmatpush1.msra.mxu0 0.0
    %2211 = vmatprep.subr.mxu0 0.0
    %2212 = vmatpush1.msra.mxu0 0.0
    %2213 = vmatprep.subr.mxu0 0.0
    %2214 = vmatpush1.msra.mxu0 0.0
    %2215 = vmatprep.subr.mxu0 0.0
    %2216 = vmatpush1.msra.mxu0 0.0
    %2217 = vmatprep.subr.mxu0 0.0
    %2218 = vmatpush1.msra.mxu0 0.0
    %2219 = vmatprep.subr.mxu0 %v1665
    %2220 = vmatpush1.msra.mxu0 %v1664
    %2221 = vmatprep.subr.mxu0 %v1636
    %2222 = vmatpush1.msra.mxu0 %v1635
    %2223 = vmatprep.subr.mxu0 %v1607
    %2224 = vmatpush1.msra.mxu0 %v1606
    %2225 = vmatprep.subr.mxu0 %v1578
    %2226 = vmatpush1.msra.mxu0 %v1577
    %2227 = vmatprep.subr.mxu0 0.0
    %2228 = vmatpush2.msra.mxu0 0.0
    %2229 = vmatprep.subr.mxu0 0.0
    %2230 = vmatpush2.msra.mxu0 0.0
    %2231 = vmatprep.subr.mxu0 0.0
    %2232 = vmatpush2.msra.mxu0 0.0
    %2233 = vmatprep.subr.mxu0 0.0
    %2234 = vmatpush2.msra.mxu0 0.0
    %2235 = vmatprep.subr.mxu0 0.0
    %2236 = vmatpush2.msra.mxu0 0.0
    %2237 = vmatprep.subr.mxu0 0.0
    %2238 = vmatpush2.msra.mxu0 0.0
    %2239 = vmatprep.subr.mxu0 0.0
    %2240 = vmatpush2.msra.mxu0 0.0
    %2241 = vmatprep.subr.mxu0 0.0
    %2242 = vmatpush2.msra.mxu0 0.0
    %2243 = vmatprep.subr.mxu0 0.0
    %2244 = vmatpush2.msra.mxu0 0.0
    %2245 = vmatprep.subr.mxu0 0.0
    %2246 = vmatpush2.msra.mxu0 0.0
    %2247 = vmatprep.subr.mxu0 0.0
    %2248 = vmatpush2.msra.mxu0 0.0
    %2249 = vmatprep.subr.mxu0 0.0
    %2250 = vmatpush2.msra.mxu0 0.0
    %2251 = vmatprep.subr.mxu0 0.0
    %2252 = vmatpush2.msra.mxu0 0.0
    %2253 = vmatprep.subr.mxu0 0.0
    %2254 = vmatpush2.msra.mxu0 0.0
    %2255 = vmatprep.subr.mxu0 0.0
    %2256 = vmatpush2.msra.mxu0 0.0
    %2257 = vmatprep.subr.mxu0 0.0
    %2258 = vmatpush2.msra.mxu0 0.0
    %2259 = vmatprep.mubr.f32.mxu0 0.0
    %2260 = vmatmul.mubr.f32.gmra.mxu0 %v1838
    %v2261 = vpop.f32.mrf.mxu0
    %v2262 = vadd.f32 %v1734, %v2261
    %v2263 = vpop.f32.mrf.mxu0
    %v2264 = vadd.f32 %v1738, %v2263
    %2265 = vdwg.mxu0
    %2266 = vmatprep.subr.mxu0 0.0
    %2267 = vmatpush1.msra.mxu0 0.0
    %2268 = vmatprep.subr.mxu0 0.0
    %2269 = vmatpush1.msra.mxu0 0.0
    %2270 = vmatprep.subr.mxu0 0.0
    %2271 = vmatpush1.msra.mxu0 0.0
    %2272 = vmatprep.subr.mxu0 0.0
    %2273 = vmatpush1.msra.mxu0 0.0
    %2274 = vmatprep.subr.mxu0 0.0
    %2275 = vmatpush1.msra.mxu0 0.0
    %2276 = vmatprep.subr.mxu0 0.0
    %2277 = vmatpush1.msra.mxu0 0.0
    %2278 = vmatprep.subr.mxu0 0.0
    %2279 = vmatpush1.msra.mxu0 0.0
    %2280 = vmatprep.subr.mxu0 0.0
    %2281 = vmatpush1.msra.mxu0 0.0
    %2282 = vmatprep.subr.mxu0 0.0
    %2283 = vmatpush1.msra.mxu0 0.0
    %2284 = vmatprep.subr.mxu0 0.0
    %2285 = vmatpush1.msra.mxu0 0.0
    %2286 = vmatprep.subr.mxu0 0.0
    %2287 = vmatpush1.msra.mxu0 0.0
    %2288 = vmatprep.subr.mxu0 0.0
    %2289 = vmatpush1.msra.mxu0 0.0
    %2290 = vmatprep.subr.mxu0 %v1667
    %2291 = vmatpush1.msra.mxu0 %v1666
    %2292 = vmatprep.subr.mxu0 %v1638
    %2293 = vmatpush1.msra.mxu0 %v1637
    %2294 = vmatprep.subr.mxu0 %v1609
    %2295 = vmatpush1.msra.mxu0 %v1608
    %2296 = vmatprep.subr.mxu0 %v1580
    %2297 = vmatpush1.msra.mxu0 %v1579
    %2298 = vmatprep.subr.mxu0 0.0
    %2299 = vmatpush2.msra.mxu0 0.0
    %2300 = vmatprep.subr.mxu0 0.0
    %2301 = vmatpush2.msra.mxu0 0.0
    %2302 = vmatprep.subr.mxu0 0.0
    %2303 = vmatpush2.msra.mxu0 0.0
    %2304 = vmatprep.subr.mxu0 0.0
    %2305 = vmatpush2.msra.mxu0 0.0
    %2306 = vmatprep.subr.mxu0 0.0
    %2307 = vmatpush2.msra.mxu0 0.0
    %2308 = vmatprep.subr.mxu0 0.0
    %2309 = vmatpush2.msra.mxu0 0.0
    %2310 = vmatprep.subr.mxu0 0.0
    %2311 = vmatpush2.msra.mxu0 0.0
    %2312 = vmatprep.subr.mxu0 0.0
    %2313 = vmatpush2.msra.mxu0 0.0
    %2314 = vmatprep.subr.mxu0 0.0
    %2315 = vmatpush2.msra.mxu0 0.0
    %2316 = vmatprep.subr.mxu0 0.0
    %2317 = vmatpush2.msra.mxu0 0.0
    %2318 = vmatprep.subr.mxu0 0.0
    %2319 = vmatpush2.msra.mxu0 0.0
    %2320 = vmatprep.subr.mxu0 0.0
    %2321 = vmatpush2.msra.mxu0 0.0
    %2322 = vmatprep.subr.mxu0 0.0
    %2323 = vmatpush2.msra.mxu0 0.0
    %2324 = vmatprep.subr.mxu0 0.0
    %2325 = vmatpush2.msra.mxu0 0.0
    %2326 = vmatprep.subr.mxu0 0.0
    %2327 = vmatpush2.msra.mxu0 0.0
    %2328 = vmatprep.subr.mxu0 0.0
    %2329 = vmatpush2.msra.mxu0 0.0
    %2330 = vmatprep.mubr.f32.mxu0 0.0
    %2331 = vmatmul.mubr.f32.gmra.mxu0 %v1838
    %v2332 = vpop.f32.mrf.mxu0
    %v2333 = vadd.f32 %v1742, %v2332
    %v2334 = vpop.f32.mrf.mxu0
    %v2335 = vadd.f32 %v1746, %v2334
    %2336 = vdwg.mxu0
    %2337 = vmatprep.subr.mxu0 0.0
    %2338 = vmatpush1.msra.mxu0 0.0
    %2339 = vmatprep.subr.mxu0 0.0
    %2340 = vmatpush1.msra.mxu0 0.0
    %2341 = vmatprep.subr.mxu0 0.0
    %2342 = vmatpush1.msra.mxu0 0.0
    %2343 = vmatprep.subr.mxu0 0.0
    %2344 = vmatpush1.msra.mxu0 0.0
    %2345 = vmatprep.subr.mxu0 0.0
    %2346 = vmatpush1.msra.mxu0 0.0
    %2347 = vmatprep.subr.mxu0 0.0
    %2348 = vmatpush1.msra.mxu0 0.0
    %2349 = vmatprep.subr.mxu0 0.0
    %2350 = vmatpush1.msra.mxu0 0.0
    %2351 = vmatprep.subr.mxu0 0.0
    %2352 = vmatpush1.msra.mxu0 0.0
    %2353 = vmatprep.subr.mxu0 0.0
    %2354 = vmatpush1.msra.mxu0 0.0
    %2355 = vmatprep.subr.mxu0 0.0
    %2356 = vmatpush1.msra.mxu0 0.0
    %2357 = vmatprep.subr.mxu0 0.0
    %2358 = vmatpush1.msra.mxu0 0.0
    %2359 = vmatprep.subr.mxu0 0.0
    %2360 = vmatpush1.msra.mxu0 0.0
    %2361 = vmatprep.subr.mxu0 %v1669
    %2362 = vmatpush1.msra.mxu0 %v1668
    %2363 = vmatprep.subr.mxu0 %v1640
    %2364 = vmatpush1.msra.mxu0 %v1639
    %2365 = vmatprep.subr.mxu0 %v1611
    %2366 = vmatpush1.msra.mxu0 %v1610
    %2367 = vmatprep.subr.mxu0 %v1582
    %2368 = vmatpush1.msra.mxu0 %v1581
    %2369 = vmatprep.subr.mxu0 0.0
    %2370 = vmatpush2.msra.mxu0 0.0
    %2371 = vmatprep.subr.mxu0 0.0
    %2372 = vmatpush2.msra.mxu0 0.0
    %2373 = vmatprep.subr.mxu0 0.0
    %2374 = vmatpush2.msra.mxu0 0.0
    %2375 = vmatprep.subr.mxu0 0.0
    %2376 = vmatpush2.msra.mxu0 0.0
    %2377 = vmatprep.subr.mxu0 0.0
    %2378 = vmatpush2.msra.mxu0 0.0
    %2379 = vmatprep.subr.mxu0 0.0
    %2380 = vmatpush2.msra.mxu0 0.0
    %2381 = vmatprep.subr.mxu0 0.0
    %2382 = vmatpush2.msra.mxu0 0.0
    %2383 = vmatprep.subr.mxu0 0.0
    %2384 = vmatpush2.msra.mxu0 0.0
    %2385 = vmatprep.subr.mxu0 0.0
    %2386 = vmatpush2.msra.mxu0 0.0
    %2387 = vmatprep.subr.mxu0 0.0
    %2388 = vmatpush2.msra.mxu0 0.0
    %2389 = vmatprep.subr.mxu0 0.0
    %2390 = vmatpush2.msra.mxu0 0.0
    %2391 = vmatprep.subr.mxu0 0.0
    %2392 = vmatpush2.msra.mxu0 0.0
    %2393 = vmatprep.subr.mxu0 0.0
    %2394 = vmatpush2.msra.mxu0 0.0
    %2395 = vmatprep.subr.mxu0 0.0
    %2396 = vmatpush2.msra.mxu0 0.0
    %2397 = vmatprep.subr.mxu0 0.0
    %2398 = vmatpush2.msra.mxu0 0.0
    %2399 = vmatprep.subr.mxu0 0.0
    %2400 = vmatpush2.msra.mxu0 0.0
    %2401 = vmatprep.mubr.f32.mxu0 0.0
    %2402 = vmatmul.mubr.f32.gmra.mxu0 %v1838
    %v2403 = vpop.f32.mrf.mxu0
    %v2404 = vadd.f32 %v1750, %v2403
    %v2405 = vpop.f32.mrf.mxu0
    %v2406 = vadd.f32 %v1754, %v2405
    %2407 = vdwg.mxu0
    %2408 = vmatprep.subr.mxu0 0.0
    %2409 = vmatpush1.msra.mxu0 0.0
    %2410 = vmatprep.subr.mxu0 0.0
    %2411 = vmatpush1.msra.mxu0 0.0
    %2412 = vmatprep.subr.mxu0 0.0
    %2413 = vmatpush1.msra.mxu0 0.0
    %2414 = vmatprep.subr.mxu0 0.0
    %2415 = vmatpush1.msra.mxu0 0.0
    %2416 = vmatprep.subr.mxu0 0.0
    %2417 = vmatpush1.msra.mxu0 0.0
    %2418 = vmatprep.subr.mxu0 0.0
    %2419 = vmatpush1.msra.mxu0 0.0
    %2420 = vmatprep.subr.mxu0 0.0
    %2421 = vmatpush1.msra.mxu0 0.0
    %2422 = vmatprep.subr.mxu0 0.0
    %2423 = vmatpush1.msra.mxu0 0.0
    %2424 = vmatprep.subr.mxu0 0.0
    %2425 = vmatpush1.msra.mxu0 0.0
    %2426 = vmatprep.subr.mxu0 0.0
    %2427 = vmatpush1.msra.mxu0 0.0
    %2428 = vmatprep.subr.mxu0 0.0
    %2429 = vmatpush1.msra.mxu0 0.0
    %2430 = vmatprep.subr.mxu0 0.0
    %2431 = vmatpush1.msra.mxu0 0.0
    %2432 = vmatprep.subr.mxu0 %v1671
    %2433 = vmatpush1.msra.mxu0 %v1670
    %2434 = vmatprep.subr.mxu0 %v1642
    %2435 = vmatpush1.msra.mxu0 %v1641
    %2436 = vmatprep.subr.mxu0 %v1613
    %2437 = vmatpush1.msra.mxu0 %v1612
    %2438 = vmatprep.subr.mxu0 %v1584
    %2439 = vmatpush1.msra.mxu0 %v1583
    %2440 = vmatprep.subr.mxu0 0.0
    %2441 = vmatpush2.msra.mxu0 0.0
    %2442 = vmatprep.subr.mxu0 0.0
    %2443 = vmatpush2.msra.mxu0 0.0
    %2444 = vmatprep.subr.mxu0 0.0
    %2445 = vmatpush2.msra.mxu0 0.0
    %2446 = vmatprep.subr.mxu0 0.0
    %2447 = vmatpush2.msra.mxu0 0.0
    %2448 = vmatprep.subr.mxu0 0.0
    %2449 = vmatpush2.msra.mxu0 0.0
    %2450 = vmatprep.subr.mxu0 0.0
    %2451 = vmatpush2.msra.mxu0 0.0
    %2452 = vmatprep.subr.mxu0 0.0
    %2453 = vmatpush2.msra.mxu0 0.0
    %2454 = vmatprep.subr.mxu0 0.0
    %2455 = vmatpush2.msra.mxu0 0.0
    %2456 = vmatprep.subr.mxu0 0.0
    %2457 = vmatpush2.msra.mxu0 0.0
    %2458 = vmatprep.subr.mxu0 0.0
    %2459 = vmatpush2.msra.mxu0 0.0
    %2460 = vmatprep.subr.mxu0 0.0
    %2461 = vmatpush2.msra.mxu0 0.0
    %2462 = vmatprep.subr.mxu0 0.0
    %2463 = vmatpush2.msra.mxu0 0.0
    %2464 = vmatprep.subr.mxu0 0.0
    %2465 = vmatpush2.msra.mxu0 0.0
    %2466 = vmatprep.subr.mxu0 0.0
    %2467 = vmatpush2.msra.mxu0 0.0
    %2468 = vmatprep.subr.mxu0 0.0
    %2469 = vmatpush2.msra.mxu0 0.0
    %2470 = vmatprep.subr.mxu0 0.0
    %2471 = vmatpush2.msra.mxu0 0.0
    %2472 = vmatprep.mubr.f32.mxu0 0.0
    %2473 = vmatmul.mubr.f32.gmra.mxu0 %v1838
    %v2474 = vpop.f32.mrf.mxu0
    %v2475 = vadd.f32 %v1758, %v2474
    %v2476 = vpop.f32.mrf.mxu0
    %v2477 = vadd.f32 %v1762, %v2476
    %2478 = vdwg.mxu0
    %2479 = vmatprep.subr.mxu0 0.0
    %2480 = vmatpush1.msra.mxu0 0.0
    %2481 = vmatprep.subr.mxu0 0.0
    %2482 = vmatpush1.msra.mxu0 0.0
    %2483 = vmatprep.subr.mxu0 0.0
    %2484 = vmatpush1.msra.mxu0 0.0
    %2485 = vmatprep.subr.mxu0 0.0
    %2486 = vmatpush1.msra.mxu0 0.0
    %2487 = vmatprep.subr.mxu0 0.0
    %2488 = vmatpush1.msra.mxu0 0.0
    %2489 = vmatprep.subr.mxu0 0.0
    %2490 = vmatpush1.msra.mxu0 0.0
    %2491 = vmatprep.subr.mxu0 0.0
    %2492 = vmatpush1.msra.mxu0 0.0
    %2493 = vmatprep.subr.mxu0 0.0
    %2494 = vmatpush1.msra.mxu0 0.0
    %2495 = vmatprep.subr.mxu0 0.0
    %2496 = vmatpush1.msra.mxu0 0.0
    %2497 = vmatprep.subr.mxu0 0.0
    %2498 = vmatpush1.msra.mxu0 0.0
    %2499 = vmatprep.subr.mxu0 0.0
    %2500 = vmatpush1.msra.mxu0 0.0
    %2501 = vmatprep.subr.mxu0 0.0
    %2502 = vmatpush1.msra.mxu0 0.0
    %2503 = vmatprep.subr.mxu0 %v1673
    %2504 = vmatpush1.msra.mxu0 %v1672
    %2505 = vmatprep.subr.mxu0 %v1644
    %2506 = vmatpush1.msra.mxu0 %v1643
    %2507 = vmatprep.subr.mxu0 %v1615
    %2508 = vmatpush1.msra.mxu0 %v1614
    %2509 = vmatprep.subr.mxu0 %v1586
    %2510 = vmatpush1.msra.mxu0 %v1585
    %2511 = vmatprep.subr.mxu0 0.0
    %2512 = vmatpush2.msra.mxu0 0.0
    %2513 = vmatprep.subr.mxu0 0.0
    %2514 = vmatpush2.msra.mxu0 0.0
    %2515 = vmatprep.subr.mxu0 0.0
    %2516 = vmatpush2.msra.mxu0 0.0
    %2517 = vmatprep.subr.mxu0 0.0
    %2518 = vmatpush2.msra.mxu0 0.0
    %2519 = vmatprep.subr.mxu0 0.0
    %2520 = vmatpush2.msra.mxu0 0.0
    %2521 = vmatprep.subr.mxu0 0.0
    %2522 = vmatpush2.msra.mxu0 0.0
    %2523 = vmatprep.subr.mxu0 0.0
    %2524 = vmatpush2.msra.mxu0 0.0
    %2525 = vmatprep.subr.mxu0 0.0
    %2526 = vmatpush2.msra.mxu0 0.0
    %2527 = vmatprep.subr.mxu0 0.0
    %2528 = vmatpush2.msra.mxu0 0.0
    %2529 = vmatprep.subr.mxu0 0.0
    %2530 = vmatpush2.msra.mxu0 0.0
    %2531 = vmatprep.subr.mxu0 0.0
    %2532 = vmatpush2.msra.mxu0 0.0
    %2533 = vmatprep.subr.mxu0 0.0
    %2534 = vmatpush2.msra.mxu0 0.0
    %2535 = vmatprep.subr.mxu0 0.0
    %2536 = vmatpush2.msra.mxu0 0.0
    %2537 = vmatprep.subr.mxu0 0.0
    %2538 = vmatpush2.msra.mxu0 0.0
    %2539 = vmatprep.subr.mxu0 0.0
    %2540 = vmatpush2.msra.mxu0 0.0
    %2541 = vmatprep.subr.mxu0 0.0
    %2542 = vmatpush2.msra.mxu0 0.0
    %2543 = vmatprep.mubr.f32.mxu0 0.0
    %2544 = vmatmul.mubr.f32.gmra.mxu0 %v1838
    %v2545 = vpop.f32.mrf.mxu0
    %v2546 = vadd.f32 %v1766, %v2545
    %v2547 = vpop.f32.mrf.mxu0
    %v2548 = vadd.f32 %v1770, %v2547
    %2549 = vdwg.mxu0
    %2550 = vmatprep.subr.mxu0 0.0
    %2551 = vmatpush1.msra.mxu0 0.0
    %2552 = vmatprep.subr.mxu0 0.0
    %2553 = vmatpush1.msra.mxu0 0.0
    %2554 = vmatprep.subr.mxu0 0.0
    %2555 = vmatpush1.msra.mxu0 0.0
    %2556 = vmatprep.subr.mxu0 0.0
    %2557 = vmatpush1.msra.mxu0 0.0
    %2558 = vmatprep.subr.mxu0 0.0
    %2559 = vmatpush1.msra.mxu0 0.0
    %2560 = vmatprep.subr.mxu0 0.0
    %2561 = vmatpush1.msra.mxu0 0.0
    %2562 = vmatprep.subr.mxu0 0.0
    %2563 = vmatpush1.msra.mxu0 0.0
    %2564 = vmatprep.subr.mxu0 0.0
    %2565 = vmatpush1.msra.mxu0 0.0
    %2566 = vmatprep.subr.mxu0 0.0
    %2567 = vmatpush1.msra.mxu0 0.0
    %2568 = vmatprep.subr.mxu0 0.0
    %2569 = vmatpush1.msra.mxu0 0.0
    %2570 = vmatprep.subr.mxu0 0.0
    %2571 = vmatpush1.msra.mxu0 0.0
    %2572 = vmatprep.subr.mxu0 0.0
    %2573 = vmatpush1.msra.mxu0 0.0
    %2574 = vmatprep.subr.mxu0 %v1675
    %2575 = vmatpush1.msra.mxu0 %v1674
    %2576 = vmatprep.subr.mxu0 %v1646
    %2577 = vmatpush1.msra.mxu0 %v1645
    %2578 = vmatprep.subr.mxu0 %v1617
    %2579 = vmatpush1.msra.mxu0 %v1616
    %2580 = vmatprep.subr.mxu0 %v1588
    %2581 = vmatpush1.msra.mxu0 %v1587
    %2582 = vmatprep.subr.mxu0 0.0
    %2583 = vmatpush2.msra.mxu0 0.0
    %2584 = vmatprep.subr.mxu0 0.0
    %2585 = vmatpush2.msra.mxu0 0.0
    %2586 = vmatprep.subr.mxu0 0.0
    %2587 = vmatpush2.msra.mxu0 0.0
    %2588 = vmatprep.subr.mxu0 0.0
    %2589 = vmatpush2.msra.mxu0 0.0
    %2590 = vmatprep.subr.mxu0 0.0
    %2591 = vmatpush2.msra.mxu0 0.0
    %2592 = vmatprep.subr.mxu0 0.0
    %2593 = vmatpush2.msra.mxu0 0.0
    %2594 = vmatprep.subr.mxu0 0.0
    %2595 = vmatpush2.msra.mxu0 0.0
    %2596 = vmatprep.subr.mxu0 0.0
    %2597 = vmatpush2.msra.mxu0 0.0
    %2598 = vmatprep.subr.mxu0 0.0
    %2599 = vmatpush2.msra.mxu0 0.0
    %2600 = vmatprep.subr.mxu0 0.0
    %2601 = vmatpush2.msra.mxu0 0.0
    %2602 = vmatprep.subr.mxu0 0.0
    %2603 = vmatpush2.msra.mxu0 0.0
    %2604 = vmatprep.subr.mxu0 0.0
    %2605 = vmatpush2.msra.mxu0 0.0
    %2606 = vmatprep.subr.mxu0 0.0
    %2607 = vmatpush2.msra.mxu0 0.0
    %2608 = vmatprep.subr.mxu0 0.0
    %2609 = vmatpush2.msra.mxu0 0.0
    %2610 = vmatprep.subr.mxu0 0.0
    %2611 = vmatpush2.msra.mxu0 0.0
    %2612 = vmatprep.subr.mxu0 0.0
    %2613 = vmatpush2.msra.mxu0 0.0
    %2614 = vmatprep.mubr.f32.mxu0 0.0
    %2615 = vmatmul.mubr.f32.gmra.mxu0 %v1838
    %v2616 = vpop.f32.mrf.mxu0
    %v2617 = vadd.f32 %v1774, %v2616
    %v2618 = vpop.f32.mrf.mxu0
    %v2619 = vadd.f32 %v1778, %v2618
    %2620 = vdwg.mxu0
    %2621 = vmatprep.subr.mxu0 0.0
    %2622 = vmatpush1.msra.mxu0 0.0
    %2623 = vmatprep.subr.mxu0 0.0
    %2624 = vmatpush1.msra.mxu0 0.0
    %2625 = vmatprep.subr.mxu0 0.0
    %2626 = vmatpush1.msra.mxu0 0.0
    %2627 = vmatprep.subr.mxu0 0.0
    %2628 = vmatpush1.msra.mxu0 0.0
    %2629 = vmatprep.subr.mxu0 0.0
    %2630 = vmatpush1.msra.mxu0 0.0
    %2631 = vmatprep.subr.mxu0 0.0
    %2632 = vmatpush1.msra.mxu0 0.0
    %2633 = vmatprep.subr.mxu0 0.0
    %2634 = vmatpush1.msra.mxu0 0.0
    %2635 = vmatprep.subr.mxu0 0.0
    %2636 = vmatpush1.msra.mxu0 0.0
    %2637 = vmatprep.subr.mxu0 0.0
    %2638 = vmatpush1.msra.mxu0 0.0
    %2639 = vmatprep.subr.mxu0 0.0
    %2640 = vmatpush1.msra.mxu0 0.0
    %2641 = vmatprep.subr.mxu0 0.0
    %2642 = vmatpush1.msra.mxu0 0.0
    %2643 = vmatprep.subr.mxu0 0.0
    %2644 = vmatpush1.msra.mxu0 0.0
    %2645 = vmatprep.subr.mxu0 %v1677
    %2646 = vmatpush1.msra.mxu0 %v1676
    %2647 = vmatprep.subr.mxu0 %v1648
    %2648 = vmatpush1.msra.mxu0 %v1647
    %2649 = vmatprep.subr.mxu0 %v1619
    %2650 = vmatpush1.msra.mxu0 %v1618
    %2651 = vmatprep.subr.mxu0 %v1590
    %2652 = vmatpush1.msra.mxu0 %v1589
    %2653 = vmatprep.subr.mxu0 0.0
    %2654 = vmatpush2.msra.mxu0 0.0
    %2655 = vmatprep.subr.mxu0 0.0
    %2656 = vmatpush2.msra.mxu0 0.0
    %2657 = vmatprep.subr.mxu0 0.0
    %2658 = vmatpush2.msra.mxu0 0.0
    %2659 = vmatprep.subr.mxu0 0.0
    %2660 = vmatpush2.msra.mxu0 0.0
    %2661 = vmatprep.subr.mxu0 0.0
    %2662 = vmatpush2.msra.mxu0 0.0
    %2663 = vmatprep.subr.mxu0 0.0
    %2664 = vmatpush2.msra.mxu0 0.0
    %2665 = vmatprep.subr.mxu0 0.0
    %2666 = vmatpush2.msra.mxu0 0.0
    %2667 = vmatprep.subr.mxu0 0.0
    %2668 = vmatpush2.msra.mxu0 0.0
    %2669 = vmatprep.subr.mxu0 0.0
    %2670 = vmatpush2.msra.mxu0 0.0
    %2671 = vmatprep.subr.mxu0 0.0
    %2672 = vmatpush2.msra.mxu0 0.0
    %2673 = vmatprep.subr.mxu0 0.0
    %2674 = vmatpush2.msra.mxu0 0.0
    %2675 = vmatprep.subr.mxu0 0.0
    %2676 = vmatpush2.msra.mxu0 0.0
    %2677 = vmatprep.subr.mxu0 0.0
    %2678 = vmatpush2.msra.mxu0 0.0
    %2679 = vmatprep.subr.mxu0 0.0
    %2680 = vmatpush2.msra.mxu0 0.0
    %2681 = vmatprep.subr.mxu0 0.0
    %2682 = vmatpush2.msra.mxu0 0.0
    %2683 = vmatprep.subr.mxu0 0.0
    %2684 = vmatpush2.msra.mxu0 0.0
    %2685 = vmatprep.mubr.f32.mxu0 0.0
    %2686 = vmatmul.mubr.f32.gmra.mxu0 %v1838
    %v2687 = vpop.f32.mrf.mxu0
    %v2688 = vadd.f32 %v1782, %v2687
    %v2689 = vpop.f32.mrf.mxu0
    %v2690 = vadd.f32 %v1786, %v2689
    %2691 = vdwg.mxu0
    %2692 = vmatprep.subr.mxu0 0.0
    %2693 = vmatpush1.msra.mxu0 0.0
    %2694 = vmatprep.subr.mxu0 0.0
    %2695 = vmatpush1.msra.mxu0 0.0
    %2696 = vmatprep.subr.mxu0 0.0
    %2697 = vmatpush1.msra.mxu0 0.0
    %2698 = vmatprep.subr.mxu0 0.0
    %2699 = vmatpush1.msra.mxu0 0.0
    %2700 = vmatprep.subr.mxu0 0.0
    %2701 = vmatpush1.msra.mxu0 0.0
    %2702 = vmatprep.subr.mxu0 0.0
    %2703 = vmatpush1.msra.mxu0 0.0
    %2704 = vmatprep.subr.mxu0 0.0
    %2705 = vmatpush1.msra.mxu0 0.0
    %2706 = vmatprep.subr.mxu0 0.0
    %2707 = vmatpush1.msra.mxu0 0.0
    %2708 = vmatprep.subr.mxu0 0.0
    %2709 = vmatpush1.msra.mxu0 0.0
    %2710 = vmatprep.subr.mxu0 0.0
    %2711 = vmatpush1.msra.mxu0 0.0
    %2712 = vmatprep.subr.mxu0 0.0
    %2713 = vmatpush1.msra.mxu0 0.0
    %2714 = vmatprep.subr.mxu0 0.0
    %2715 = vmatpush1.msra.mxu0 0.0
    %2716 = vmatprep.subr.mxu0 %v1679
    %2717 = vmatpush1.msra.mxu0 %v1678
    %2718 = vmatprep.subr.mxu0 %v1650
    %2719 = vmatpush1.msra.mxu0 %v1649
    %2720 = vmatprep.subr.mxu0 %v1621
    %2721 = vmatpush1.msra.mxu0 %v1620
    %2722 = vmatprep.subr.mxu0 %v1592
    %2723 = vmatpush1.msra.mxu0 %v1591
    %2724 = vmatprep.subr.mxu0 0.0
    %2725 = vmatpush2.msra.mxu0 0.0
    %2726 = vmatprep.subr.mxu0 0.0
    %2727 = vmatpush2.msra.mxu0 0.0
    %2728 = vmatprep.subr.mxu0 0.0
    %2729 = vmatpush2.msra.mxu0 0.0
    %2730 = vmatprep.subr.mxu0 0.0
    %2731 = vmatpush2.msra.mxu0 0.0
    %2732 = vmatprep.subr.mxu0 0.0
    %2733 = vmatpush2.msra.mxu0 0.0
    %2734 = vmatprep.subr.mxu0 0.0
    %2735 = vmatpush2.msra.mxu0 0.0
    %2736 = vmatprep.subr.mxu0 0.0
    %2737 = vmatpush2.msra.mxu0 0.0
    %2738 = vmatprep.subr.mxu0 0.0
    %2739 = vmatpush2.msra.mxu0 0.0
    %2740 = vmatprep.subr.mxu0 0.0
    %2741 = vmatpush2.msra.mxu0 0.0
    %2742 = vmatprep.subr.mxu0 0.0
    %2743 = vmatpush2.msra.mxu0 0.0
    %2744 = vmatprep.subr.mxu0 0.0
    %2745 = vmatpush2.msra.mxu0 0.0
    %2746 = vmatprep.subr.mxu0 0.0
    %2747 = vmatpush2.msra.mxu0 0.0
    %2748 = vmatprep.subr.mxu0 0.0
    %2749 = vmatpush2.msra.mxu0 0.0
    %2750 = vmatprep.subr.mxu0 0.0
    %2751 = vmatpush2.msra.mxu0 0.0
    %2752 = vmatprep.subr.mxu0 0.0
    %2753 = vmatpush2.msra.mxu0 0.0
    %2754 = vmatprep.subr.mxu0 0.0
    %2755 = vmatpush2.msra.mxu0 0.0
    %2756 = vmatprep.mubr.f32.mxu0 0.0
    %2757 = vmatmul.mubr.f32.gmra.mxu0 %v1838
    %v2758 = vpop.f32.mrf.mxu0
    %v2759 = vadd.f32 %v1790, %v2758
    %v2760 = vpop.f32.mrf.mxu0
    %v2761 = vadd.f32 %v1794, %v2760
    %2762 = vdwg.mxu0
    %2763 = vmatprep.subr.mxu0 0.0
    %2764 = vmatpush1.msra.mxu0 0.0
    %2765 = vmatprep.subr.mxu0 0.0
    %2766 = vmatpush1.msra.mxu0 0.0
    %2767 = vmatprep.subr.mxu0 0.0
    %2768 = vmatpush1.msra.mxu0 0.0
    %2769 = vmatprep.subr.mxu0 0.0
    %2770 = vmatpush1.msra.mxu0 0.0
    %2771 = vmatprep.subr.mxu0 0.0
    %2772 = vmatpush1.msra.mxu0 0.0
    %2773 = vmatprep.subr.mxu0 0.0
    %2774 = vmatpush1.msra.mxu0 0.0
    %2775 = vmatprep.subr.mxu0 0.0
    %2776 = vmatpush1.msra.mxu0 0.0
    %2777 = vmatprep.subr.mxu0 0.0
    %2778 = vmatpush1.msra.mxu0 0.0
    %2779 = vmatprep.subr.mxu0 0.0
    %2780 = vmatpush1.msra.mxu0 0.0
    %2781 = vmatprep.subr.mxu0 0.0
    %2782 = vmatpush1.msra.mxu0 0.0
    %2783 = vmatprep.subr.mxu0 0.0
    %2784 = vmatpush1.msra.mxu0 0.0
    %2785 = vmatprep.subr.mxu0 0.0
    %2786 = vmatpush1.msra.mxu0 0.0
    %2787 = vmatprep.subr.mxu0 %v1681
    %2788 = vmatpush1.msra.mxu0 %v1680
    %2789 = vmatprep.subr.mxu0 %v1652
    %2790 = vmatpush1.msra.mxu0 %v1651
    %2791 = vmatprep.subr.mxu0 %v1623
    %2792 = vmatpush1.msra.mxu0 %v1622
    %2793 = vmatprep.subr.mxu0 %v1594
    %2794 = vmatpush1.msra.mxu0 %v1593
    %2795 = vmatprep.subr.mxu0 0.0
    %2796 = vmatpush2.msra.mxu0 0.0
    %2797 = vmatprep.subr.mxu0 0.0
    %2798 = vmatpush2.msra.mxu0 0.0
    %2799 = vmatprep.subr.mxu0 0.0
    %2800 = vmatpush2.msra.mxu0 0.0
    %2801 = vmatprep.subr.mxu0 0.0
    %2802 = vmatpush2.msra.mxu0 0.0
    %2803 = vmatprep.subr.mxu0 0.0
    %2804 = vmatpush2.msra.mxu0 0.0
    %2805 = vmatprep.subr.mxu0 0.0
    %2806 = vmatpush2.msra.mxu0 0.0
    %2807 = vmatprep.subr.mxu0 0.0
    %2808 = vmatpush2.msra.mxu0 0.0
    %2809 = vmatprep.subr.mxu0 0.0
    %2810 = vmatpush2.msra.mxu0 0.0
    %2811 = vmatprep.subr.mxu0 0.0
    %2812 = vmatpush2.msra.mxu0 0.0
    %2813 = vmatprep.subr.mxu0 0.0
    %2814 = vmatpush2.msra.mxu0 0.0
    %2815 = vmatprep.subr.mxu0 0.0
    %2816 = vmatpush2.msra.mxu0 0.0
    %2817 = vmatprep.subr.mxu0 0.0
    %2818 = vmatpush2.msra.mxu0 0.0
    %2819 = vmatprep.subr.mxu0 0.0
    %2820 = vmatpush2.msra.mxu0 0.0
    %2821 = vmatprep.subr.mxu0 0.0
    %2822 = vmatpush2.msra.mxu0 0.0
    %2823 = vmatprep.subr.mxu0 0.0
    %2824 = vmatpush2.msra.mxu0 0.0
    %2825 = vmatprep.subr.mxu0 0.0
    %2826 = vmatpush2.msra.mxu0 0.0
    %2827 = vmatprep.mubr.f32.mxu0 0.0
    %2828 = vmatmul.mubr.f32.gmra.mxu0 %v1838
    %v2829 = vpop.f32.mrf.mxu0
    %v2830 = vadd.f32 %v1798, %v2829
    %v2831 = vpop.f32.mrf.mxu0
    %v2832 = vadd.f32 %v1802, %v2831
    %2833 = vdwg.mxu0
    %2834 = vmatprep.subr.mxu0 0.0
    %2835 = vmatpush1.msra.mxu0 0.0
    %2836 = vmatprep.subr.mxu0 0.0
    %2837 = vmatpush1.msra.mxu0 0.0
    %2838 = vmatprep.subr.mxu0 0.0
    %2839 = vmatpush1.msra.mxu0 0.0
    %2840 = vmatprep.subr.mxu0 0.0
    %2841 = vmatpush1.msra.mxu0 0.0
    %2842 = vmatprep.subr.mxu0 0.0
    %2843 = vmatpush1.msra.mxu0 0.0
    %2844 = vmatprep.subr.mxu0 0.0
    %2845 = vmatpush1.msra.mxu0 0.0
    %2846 = vmatprep.subr.mxu0 0.0
    %2847 = vmatpush1.msra.mxu0 0.0
    %2848 = vmatprep.subr.mxu0 0.0
    %2849 = vmatpush1.msra.mxu0 0.0
    %2850 = vmatprep.subr.mxu0 0.0
    %2851 = vmatpush1.msra.mxu0 0.0
    %2852 = vmatprep.subr.mxu0 0.0
    %2853 = vmatpush1.msra.mxu0 0.0
    %2854 = vmatprep.subr.mxu0 0.0
    %2855 = vmatpush1.msra.mxu0 0.0
    %2856 = vmatprep.subr.mxu0 0.0
    %2857 = vmatpush1.msra.mxu0 0.0
    %2858 = vmatprep.subr.mxu0 0.0
    %2859 = vmatpush1.msra.mxu0 %v1682
    %2860 = vmatprep.subr.mxu0 0.0
    %2861 = vmatpush1.msra.mxu0 %v1653
    %2862 = vmatprep.subr.mxu0 0.0
    %2863 = vmatpush1.msra.mxu0 %v1624
    %2864 = vmatprep.subr.mxu0 0.0
    %2865 = vmatpush1.msra.mxu0 %v1595
    %2866 = vmatprep.subr.mxu0 0.0
    %2867 = vmatpush2.msra.mxu0 0.0
    %2868 = vmatprep.subr.mxu0 0.0
    %2869 = vmatpush2.msra.mxu0 0.0
    %2870 = vmatprep.subr.mxu0 0.0
    %2871 = vmatpush2.msra.mxu0 0.0
    %2872 = vmatprep.subr.mxu0 0.0
    %2873 = vmatpush2.msra.mxu0 0.0
    %2874 = vmatprep.subr.mxu0 0.0
    %2875 = vmatpush2.msra.mxu0 0.0
    %2876 = vmatprep.subr.mxu0 0.0
    %2877 = vmatpush2.msra.mxu0 0.0
    %2878 = vmatprep.subr.mxu0 0.0
    %2879 = vmatpush2.msra.mxu0 0.0
    %2880 = vmatprep.subr.mxu0 0.0
    %2881 = vmatpush2.msra.mxu0 0.0
    %2882 = vmatprep.subr.mxu0 0.0
    %2883 = vmatpush2.msra.mxu0 0.0
    %2884 = vmatprep.subr.mxu0 0.0
    %2885 = vmatpush2.msra.mxu0 0.0
    %2886 = vmatprep.subr.mxu0 0.0
    %2887 = vmatpush2.msra.mxu0 0.0
    %2888 = vmatprep.subr.mxu0 0.0
    %2889 = vmatpush2.msra.mxu0 0.0
    %2890 = vmatprep.subr.mxu0 0.0
    %2891 = vmatpush2.msra.mxu0 0.0
    %2892 = vmatprep.subr.mxu0 0.0
    %2893 = vmatpush2.msra.mxu0 0.0
    %2894 = vmatprep.subr.mxu0 0.0
    %2895 = vmatpush2.msra.mxu0 0.0
    %2896 = vmatprep.subr.mxu0 0.0
    %2897 = vmatpush2.msra.mxu0 0.0
    %2898 = vmatprep.mubr.f32.mxu0 0.0
    %2899 = vmatmul.mubr.f32.gmra.mxu0 %v1838
    %v2900 = vpop.f32.mrf.mxu0
    %v2901 = vadd.f32 %v1806, %v2900
    %v2902 = vpop.f32.mrf.mxu0
    %2903 = vdwg.mxu0
    %2904 = vst [vmem:[#allocation2] sm:$0xff] %v1907
    %2905 = vst [vmem:[#allocation2 + $0x8] sm:$0xff] %v1909
    %2906 = vst [vmem:[#allocation2 + $0x10] sm:$0xff] %v1978
    %2907 = vst [vmem:[#allocation2 + $0x18] sm:$0xff] %v1980
    %2908 = vst [vmem:[#allocation2 + $0x20] sm:$0xff] %v2049
    %2909 = vst [vmem:[#allocation2 + $0x28] sm:$0xff] %v2051
    %2910 = vst [vmem:[#allocation2 + $0x30] sm:$0xff] %v2120
    %2911 = vst [vmem:[#allocation2 + $0x38] sm:$0xff] %v2122
    %2912 = vst [vmem:[#allocation2 + $0x40] sm:$0xff] %v2191
    %2913 = vst [vmem:[#allocation2 + $0x48] sm:$0xff] %v2193
    %2914 = vst [vmem:[#allocation2 + $0x50] sm:$0xff] %v2262
    %2915 = vst [vmem:[#allocation2 + $0x58] sm:$0xff] %v2264
    %2916 = vst [vmem:[#allocation2 + $0x60] sm:$0xff] %v2333
    %2917 = vst [vmem:[#allocation2 + $0x68] sm:$0xff] %v2335
    %2918 = vst [vmem:[#allocation2 + $0x70] sm:$0xff] %v2404
    %2919 = vst [vmem:[#allocation2 + $0x78] sm:$0xff] %v2406
    %2920 = vst [vmem:[#allocation2 + $0x80] sm:$0xff] %v2475
    %2921 = vst [vmem:[#allocation2 + $0x88] sm:$0xff] %v2477
    %2922 = vst [vmem:[#allocation2 + $0x90] sm:$0xff] %v2546
    %2923 = vst [vmem:[#allocation2 + $0x98] sm:$0xff] %v2548
    %2924 = vst [vmem:[#allocation2 + $0xa0] sm:$0xff] %v2617
    %2925 = vst [vmem:[#allocation2 + $0xa8] sm:$0xff] %v2619
    %2926 = vst [vmem:[#allocation2 + $0xb0] sm:$0xff] %v2688
    %2927 = vst [vmem:[#allocation2 + $0xb8] sm:$0xff] %v2690
    %2928 = vst [vmem:[#allocation2 + $0xc0] sm:$0xff] %v2759
    %2929 = vst [vmem:[#allocation2 + $0xc8] sm:$0xff] %v2761
    %2930 = vst [vmem:[#allocation2 + $0xd0] sm:$0xff] %v2830
    %2931 = vst [vmem:[#allocation2 + $0xd8] sm:$0xff] %v2832
    %2932 = vst.msk [vmem:[#allocation2 + $0xe0] sm:$0xff] %vm508, %v2901
    // Predicated region
    $region22: #{_vae_forward_impl.1} parent=1 // pred_check
      _
    $region23: #{_vae_forward_impl.1} parent=1 // pred_check_branch
      %2934 = sbr.rel (0) target = $region25
    $region24: #{_vae_forward_impl.1} parent=1 // pred_region
      %s2936 = ssub.s32 3712, 3712
      %2937 = vsyncadd [#allocation3], %s2936
      %s2939 = sshll.u32 [#allocation2], 4
      %s2940 = int_to_ptr.vmem [resolvable:$true] %s2939
      %2942 = dma.vmem_to_hbm [thread:$0]  %s2940, 3712, %s5, [#allocation3]
    $region25: #{_vae_forward_impl.1} parent=1 // pred_fallthru
      _
    // Predicated region
    $region26: #{_vae_forward_impl.1} parent=1 // pred_check
      _
    $region27: #{_vae_forward_impl.1} parent=1 // pred_check_branch
      %2944 = sbr.rel (0) target = $region29
    $region28: #{_vae_forward_impl.1} parent=1 // pred_region
      %2945 = dma.done [#allocation3], 3712
    $region29: #{_vae_forward_impl.1} parent=1 // pred_fallthru
      _
    %2946 = vsyncpa [#allocation3], 1

</llo_original>
